<compile_context>
chip_gen: v5e
topology: v5e:2x2
jax: 0.10.0
libtpu: 0.0.40
codegen_flags: <defaults>
</compile_context>

<pallas_src>
import jax
import jax.numpy as jnp
from jax.experimental import pallas as pl
from jax.experimental.pallas import tpu as pltpu

LANE = 128


def _round_up(x, m):
    return (x + m - 1) // m * m


# ------------------------------------------------------------------
# Single fused kernel: all GraphConv+BN+ReLU layers, mean-pool, FC, sigmoid
# ------------------------------------------------------------------
def fused_gnn_kernel(x_ref, a_ref, w_ref, b_ref, p_ref, wfc_ref, bfc_ref, o_ref):
    num_layers, _, d = w_ref.shape
    h16 = x_ref[...]                                   # [Np, D] bf16
    # NOTE: padded node rows (>= n) pick up ReLU(bias) after layer 1, but A's
    # padded columns and the pool matrix's padded columns are zero, so they
    # never contaminate real rows or the mean-pooled output.
    for layer in range(num_layers):                    # static unroll (L small)
        # TODO(synk): switch to lax.fori_loop(..., unroll=True) if num_layers > 4.
        # sum-aggregation over weighted neighbours: bf16 MXU, f32 accumulate
        agg = jnp.dot(a_ref[...], h16,
                      preferred_element_type=jnp.float32)              # [Np, D] f32
        # GraphConv projection (BN already folded into W, b), no concat:
        #   h = agg @ W_rel' + h @ W_root' + b'
        h = (jnp.dot(agg.astype(jnp.bfloat16), w_ref[layer, :d, :],
                     preferred_element_type=jnp.float32)
             + jnp.dot(h16, w_ref[layer, d:, :],
                       preferred_element_type=jnp.float32)
             + b_ref[layer])                                            # [Np, D] f32
        h = jnp.maximum(h, jnp.float32(0.0))           # ReLU; dropout(eval) = id
        h16 = h.astype(jnp.bfloat16)
    # global mean pool: pool matrix pre-normalized by clamped counts
    pooled = jnp.dot(p_ref[...], h16, preferred_element_type=jnp.float32)   # [Gp, D]
    # final Linear(H, 1) embedded lane-dense in column 0 of a [D, 128] weight
    logits = jnp.dot(pooled.astype(jnp.bfloat16), wfc_ref[...],
                     preferred_element_type=jnp.float32) + bfc_ref[...]     # [Gp, 128]
    o_ref[...] = jax.nn.sigmoid(logits)


# ------------------------------------------------------------------
# Parameter init (PyTorch-like) + BN folding / padding / stacking
# ------------------------------------------------------------------
def init_params(key, input_dim, num_layers, hidden):
    params = []
    dims = [input_dim] + [hidden] * num_layers
    for i in range(num_layers):
        fin, fout = dims[i], dims[i + 1]
        key, k1, k2, k3, k4, k5 = jax.random.split(key, 6)
        bound = 1.0 / jnp.sqrt(jnp.float32(fin))
        params.append({
            # stored already transposed for x @ W
            "w_rel": jax.random.uniform(k1, (fin, fout), jnp.float32, -bound, bound),
            "b_rel": jax.random.uniform(k2, (1, fout), jnp.float32, -bound, bound),
            "w_root": jax.random.uniform(k3, (fin, fout), jnp.float32, -bound, bound),
            "gamma": jnp.ones((1, fout), jnp.float32)
                     + 0.1 * jax.random.normal(k4, (1, fout), jnp.float32),
            "beta": 0.1 * jax.random.normal(k5, (1, fout), jnp.float32),
            "run_mean": jnp.zeros((1, fout), jnp.float32),
            "run_var": jnp.ones((1, fout), jnp.float32),
        })
    key, k1, k2 = jax.random.split(key, 3)
    bound = 1.0 / jnp.sqrt(jnp.float32(hidden))
    fc = {"w": jax.random.uniform(k1, (hidden, 1), jnp.float32, -bound, bound),
          "b": jax.random.uniform(k2, (1, 1), jnp.float32, -bound, bound)}
    return params, fc


def fold_and_pad_params(layer_params, fc_params, input_dim, hidden, d, eps=1e-5):
    """Fold eval-mode BatchNorm into the projections, stack [W_rel; W_root] per
    layer, zero-pad feature dims to d, and cast the matmul weights to bf16."""
    ws, bs = [], []
    for i, lp in enumerate(layer_params):
        fin = input_dim if i == 0 else hidden
        s = lp["gamma"] * jax.lax.rsqrt(lp["run_var"] + jnp.float32(eps))   # [1, H]
        w_rel = lp["w_rel"] * s
        w_root = lp["w_root"] * s
        b = (lp["b_rel"] - lp["run_mean"]) * s + lp["beta"]
        W = jnp.zeros((2 * d, d), jnp.float32)
        W = W.at[:fin, :hidden].set(w_rel)           # rows [0, d): act on agg
        W = W.at[d:d + fin, :hidden].set(w_root)     # rows [d, 2d): act on root h
        B = jnp.zeros((1, d), jnp.float32).at[:, :hidden].set(b)
        ws.append(W)
        bs.append(B)
    w_stk = jnp.stack(ws).astype(jnp.bfloat16)       # [L, 2d, d] bf16
    b_stk = jnp.stack(bs)                            # [L, 1, d]  f32
    wfc = (jnp.zeros((d, LANE), jnp.float32)
           .at[:hidden, :1].set(fc_params["w"])).astype(jnp.bfloat16)
    bfc = jnp.zeros((1, LANE), jnp.float32).at[:, :1].set(fc_params["b"])
    return w_stk, b_stk, wfc, bfc


# ------------------------------------------------------------------
# Chip-aware sizing helpers
# ------------------------------------------------------------------
def _vmem_capacity_bytes():
    try:
        return int(pltpu.get_tpu_info().vmem_capacity_bytes)
    except Exception:
        kind = jax.devices()[0].device_kind.lower()
        # v7x has 64 MiB/TC; v5e/v6e have 128 MiB.
        return (64 if "7" in kind else 128) * 1024 * 1024


def _mxu_contract_align():
    kind = jax.devices()[0].device_kind.lower()
    # v5e MXU is 128-wide; v6e/v7x MXUs are 256-wide.
    return 128 if "v5" in kind else 256


# ------------------------------------------------------------------
# Forward wrapper (padding / BN-folding / single pallas_call)
# ------------------------------------------------------------------
def forward(x, adj, batch, num_graphs, layer_params, fc_params):
    n, input_dim = x.shape
    hidden = layer_params[0]["w_rel"].shape[1]

    k_align = _mxu_contract_align()
    d = _round_up(max(input_dim, hidden), LANE)
    if d > LANE:                         # d is itself a contraction dim for layers > 0
        d = _round_up(d, k_align)
    n_pad = _round_up(n, k_align)        # contraction dim of A@h and pool@h
    g_pad = _round_up(num_graphs, 16)    # bf16 sublane tile for the pool matrix

    # pad node features / adjacency; bf16 operands, f32 accumulation on MXU
    x_p = (jnp.zeros((n_pad, d), jnp.float32)
           .at[:n, :input_dim].set(x)).astype(jnp.bfloat16)
    a_p = (jnp.zeros((n_pad, n_pad), jnp.float32)
           .at[:n, :n].set(adj)).astype(jnp.bfloat16)

    # pre-normalized mean-pool matrix (counts clamped -> no divide in kernel,
    # no NaN/Inf for empty graphs)
    pool = (batch[None, :] == jnp.arange(num_graphs, dtype=batch.dtype)[:, None]
            ).astype(jnp.float32)                                     # [G, N]
    counts = jnp.maximum(pool.sum(axis=1, keepdims=True), 1.0)
    p_p = (jnp.zeros((g_pad, n_pad), jnp.float32)
           .at[:num_graphs, :n].set(pool / counts)).astype(jnp.bfloat16)

    w_stk, b_stk, wfc, bfc = fold_and_pad_params(
        layer_params, fc_params, input_dim, hidden, d)

    # derive VMEM budget from the actual resident footprint, clamped per chip
    operands = (x_p, a_p, w_stk, b_stk, p_p, wfc, bfc)
    in_bytes = sum(int(t.size) * t.dtype.itemsize for t in operands)
    # kernel live intermediates: agg(f32) + h(f32) + h16(bf16) + pooled + out
    scratch_bytes = n_pad * d * (4 + 4 + 2) + g_pad * d * 4 + g_pad * LANE * 4
    vmem_cap = _vmem_capacity_bytes()
    vmem_limit = min(int(vmem_cap * 0.9),
                     max(32 * 1024 * 1024, 2 * (in_bytes + scratch_bytes)))
    # TODO(synk): graphs whose bf16 adjacency exceeds ~0.9*VMEM (Np ~ 5k on v7x,
    # ~7k on v5e/v6e) need an A-streaming fallback (A kept in HBM via
    # BlockSpec(memory_space=pl.ANY) + pltpu.emit_pipeline over K tiles) and,
    # on v7x, a parallel grid axis to use both TensorCores.

    vmem = pl.BlockSpec(memory_space=pltpu.MemorySpace.VMEM)
    out = pl.pallas_call(
        fused_gnn_kernel,
        out_shape=jax.ShapeDtypeStruct((g_pad, LANE), jnp.float32),
        in_specs=[vmem] * 7,
        out_specs=vmem,
        compiler_params=pltpu.CompilerParams(vmem_limit_bytes=vmem_limit),
    )(x_p, a_p, w_stk, b_stk, p_p, wfc, bfc)
    return out[:num_graphs, :1]


# ------------------------------------------------------------------
# Pure-JAX reference (un-fused, un-folded, f32) for correctness check
# ------------------------------------------------------------------
def reference_forward(x, adj, batch, num_graphs, layer_params, fc_params, eps=1e-5):
    h = x
    for lp in layer_params:
        agg = adj @ h
        out = agg @ lp["w_rel"] + lp["b_rel"] + h @ lp["w_root"]
        out = ((out - lp["run_mean"]) * jax.lax.rsqrt(lp["run_var"] + eps)
               * lp["gamma"] + lp["beta"])
        h = jnp.maximum(out, 0.0)
    pool = (batch[None, :] == jnp.arange(num_graphs, dtype=batch.dtype)[:, None]
            ).astype(jnp.float32)
    counts = jnp.maximum(pool.sum(axis=1, keepdims=True), 1.0)
    pooled = (pool @ h) / counts
    return jax.nn.sigmoid(pooled @ fc_params["w"] + fc_params["b"])


if __name__ == "__main__":
    key = jax.random.PRNGKey(0)

    # small synthetic graph batch: 2 graphs, 8 nodes each
    N = 16             # total nodes
    INPUT_DIM = 8
    HIDDEN = 32
    NUM_LAYERS = 2
    NUM_GRAPHS = 2
    NUM_EDGES = 40

    key, kx, ksrc, kdst, kw = jax.random.split(key, 5)
    x = jax.random.normal(kx, (N, INPUT_DIM), jnp.float32)

    # random edges (edge_index) + positive edge weights (edge_attr)
    src = jax.random.randint(ksrc, (NUM_EDGES,), 0, N)
    dst = jax.random.randint(kdst, (NUM_EDGES,), 0, N)
    edge_weight = jax.random.uniform(kw, (NUM_EDGES,), jnp.float32, 0.1, 1.0)

    # dense weighted adjacency: A[dst, src] += w  (sum aggregation)
    adj = jnp.zeros((N, N), jnp.float32).at[dst, src].add(edge_weight)

    # batch assignment: first 8 nodes -> graph 0, last 8 -> graph 1
    batch = jnp.concatenate([jnp.zeros(8, jnp.int32), jnp.ones(8, jnp.int32)])

    layer_params, fc_params = init_params(key, INPUT_DIM, NUM_LAYERS, HIDDEN)

    out = forward(x, adj, batch, NUM_GRAPHS, layer_params, fc_params)
    out = jax.block_until_ready(out)

    ref = reference_forward(x, adj, batch, NUM_GRAPHS, layer_params, fc_params)

    assert out.shape == (NUM_GRAPHS, 1)
    assert bool(jnp.all((out >= 0.0) & (out <= 1.0)))
    assert bool(jnp.allclose(out, ref, atol=5e-2, rtol=5e-2)), (out, ref)
    print("KERNEL_OK")
</pallas_src>

<mosaic_0001>
module attributes {stable_mosaic.version = 11 : i64} {
  func.func @fused_gnn_kernel(%arg0: memref<256x128xbf16, #tpu.memory_space<vmem>>, %arg1: memref<256x256xbf16, #tpu.memory_space<vmem>>, %arg2: memref<2x256x128xbf16, #tpu.memory_space<vmem>>, %arg3: memref<2x1x128xf32, #tpu.memory_space<vmem>>, %arg4: memref<16x256xbf16, #tpu.memory_space<vmem>>, %arg5: memref<128x128xbf16, #tpu.memory_space<vmem>>, %arg6: memref<1x128xf32, #tpu.memory_space<vmem>>, %arg7: memref<16x128xf32, #tpu.memory_space<vmem>>) attributes {dimension_semantics = [], scalar_prefetch = 0 : i64, scratch_operands = 0 : i64, tpu.core_type = #tpu.core_type<tc>} {
    %c0 = arith.constant 0 : index
    %c0_0 = arith.constant 0 : index
    %0 = vector.load %arg0[%c0, %c0_0] : memref<256x128xbf16, #tpu.memory_space<vmem>>, vector<256x128xbf16>
    %c0_1 = arith.constant 0 : index
    %c0_2 = arith.constant 0 : index
    %1 = vector.load %arg1[%c0_1, %c0_2] : memref<256x256xbf16, #tpu.memory_space<vmem>>, vector<256x256xbf16>
    %cst = arith.constant dense<0.000000e+00> : vector<256x128xf32>
    %2 = tpu.matmul %1, %0, %cst {dimension_numbers = #tpu.dot_dimension_numbers<[1], [0], [0], [1], [0, 0, 1, 1], [], []>} : vector<256x256xbf16>, vector<256x128xbf16>, vector<256x128xf32> -> vector<256x128xf32>
    %3 = arith.truncf %2 : vector<256x128xf32> to vector<256x128xbf16>
    %c0_3 = arith.constant 0 : index
    %c0_4 = arith.constant 0 : index
    %c0_5 = arith.constant 0 : index
    %4 = vector.load %arg2[%c0_3, %c0_4, %c0_5] : memref<2x256x128xbf16, #tpu.memory_space<vmem>>, vector<1x128x128xbf16>
    %5 = vector.shape_cast %4 : vector<1x128x128xbf16> to vector<128x128xbf16>
    %cst_6 = arith.constant dense<0.000000e+00> : vector<256x128xf32>
    %6 = tpu.matmul %3, %5, %cst_6 {dimension_numbers = #tpu.dot_dimension_numbers<[1], [0], [0], [1], [0, 0, 1, 1], [], []>} : vector<256x128xbf16>, vector<128x128xbf16>, vector<256x128xf32> -> vector<256x128xf32>
    %c0_7 = arith.constant 0 : index
    %c128 = arith.constant 128 : index
    %c0_8 = arith.constant 0 : index
    %7 = vector.load %arg2[%c0_7, %c128, %c0_8] : memref<2x256x128xbf16, #tpu.memory_space<vmem>>, vector<1x128x128xbf16>
    %8 = vector.shape_cast %7 : vector<1x128x128xbf16> to vector<128x128xbf16>
    %cst_9 = arith.constant dense<0.000000e+00> : vector<256x128xf32>
    %9 = tpu.matmul %0, %8, %cst_9 {dimension_numbers = #tpu.dot_dimension_numbers<[1], [0], [0], [1], [0, 0, 1, 1], [], []>} : vector<256x128xbf16>, vector<128x128xbf16>, vector<256x128xf32> -> vector<256x128xf32>
    %10 = arith.addf %6, %9 : vector<256x128xf32>
    %c0_10 = arith.constant 0 : index
    %c0_11 = arith.constant 0 : index
    %c0_12 = arith.constant 0 : index
    %11 = vector.load %arg3[%c0_10, %c0_11, %c0_12] : memref<2x1x128xf32, #tpu.memory_space<vmem>>, vector<1x1x128xf32>
    %12 = vector.shape_cast %11 : vector<1x1x128xf32> to vector<1x128xf32>
    %13 = vector.broadcast %12 : vector<1x128xf32> to vector<256x128xf32>
    %14 = arith.addf %10, %13 : vector<256x128xf32>
    %cst_13 = arith.constant 0.000000e+00 : f32
    %15 = vector.broadcast %cst_13 : f32 to vector<256x128xf32>
    %16 = arith.maximumf %14, %15 : vector<256x128xf32>
    %17 = arith.truncf %16 : vector<256x128xf32> to vector<256x128xbf16>
    %c0_14 = arith.constant 0 : index
    %c0_15 = arith.constant 0 : index
    %18 = vector.load %arg1[%c0_14, %c0_15] : memref<256x256xbf16, #tpu.memory_space<vmem>>, vector<256x256xbf16>
    %cst_16 = arith.constant dense<0.000000e+00> : vector<256x128xf32>
    %19 = tpu.matmul %18, %17, %cst_16 {dimension_numbers = #tpu.dot_dimension_numbers<[1], [0], [0], [1], [0, 0, 1, 1], [], []>} : vector<256x256xbf16>, vector<256x128xbf16>, vector<256x128xf32> -> vector<256x128xf32>
    %20 = arith.truncf %19 : vector<256x128xf32> to vector<256x128xbf16>
    %c1 = arith.constant 1 : index
    %c0_17 = arith.constant 0 : index
    %c0_18 = arith.constant 0 : index
    %21 = vector.load %arg2[%c1, %c0_17, %c0_18] : memref<2x256x128xbf16, #tpu.memory_space<vmem>>, vector<1x128x128xbf16>
    %22 = vector.shape_cast %21 : vector<1x128x128xbf16> to vector<128x128xbf16>
    %cst_19 = arith.constant dense<0.000000e+00> : vector<256x128xf32>
    %23 = tpu.matmul %20, %22, %cst_19 {dimension_numbers = #tpu.dot_dimension_numbers<[1], [0], [0], [1], [0, 0, 1, 1], [], []>} : vector<256x128xbf16>, vector<128x128xbf16>, vector<256x128xf32> -> vector<256x128xf32>
    %c1_20 = arith.constant 1 : index
    %c128_21 = arith.constant 128 : index
    %c0_22 = arith.constant 0 : index
    %24 = vector.load %arg2[%c1_20, %c128_21, %c0_22] : memref<2x256x128xbf16, #tpu.memory_space<vmem>>, vector<1x128x128xbf16>
    %25 = vector.shape_cast %24 : vector<1x128x128xbf16> to vector<128x128xbf16>
    %cst_23 = arith.constant dense<0.000000e+00> : vector<256x128xf32>
    %26 = tpu.matmul %17, %25, %cst_23 {dimension_numbers = #tpu.dot_dimension_numbers<[1], [0], [0], [1], [0, 0, 1, 1], [], []>} : vector<256x128xbf16>, vector<128x128xbf16>, vector<256x128xf32> -> vector<256x128xf32>
    %27 = arith.addf %23, %26 : vector<256x128xf32>
    %c1_24 = arith.constant 1 : index
    %c0_25 = arith.constant 0 : index
    %c0_26 = arith.constant 0 : index
    %28 = vector.load %arg3[%c1_24, %c0_25, %c0_26] : memref<2x1x128xf32, #tpu.memory_space<vmem>>, vector<1x1x128xf32>
    %29 = vector.shape_cast %28 : vector<1x1x128xf32> to vector<1x128xf32>
    %30 = vector.broadcast %29 : vector<1x128xf32> to vector<256x128xf32>
    %31 = arith.addf %27, %30 : vector<256x128xf32>
    %cst_27 = arith.constant 0.000000e+00 : f32
    %32 = vector.broadcast %cst_27 : f32 to vector<256x128xf32>
    %33 = arith.maximumf %31, %32 : vector<256x128xf32>
    %34 = arith.truncf %33 : vector<256x128xf32> to vector<256x128xbf16>
    %c0_28 = arith.constant 0 : index
    %c0_29 = arith.constant 0 : index
    %35 = vector.load %arg4[%c0_28, %c0_29] : memref<16x256xbf16, #tpu.memory_space<vmem>>, vector<16x256xbf16>
    %cst_30 = arith.constant dense<0.000000e+00> : vector<16x128xf32>
    %36 = tpu.matmul %35, %34, %cst_30 {dimension_numbers = #tpu.dot_dimension_numbers<[1], [0], [0], [1], [0, 0, 1, 1], [], []>} : vector<16x256xbf16>, vector<256x128xbf16>, vector<16x128xf32> -> vector<16x128xf32>
    %37 = arith.truncf %36 : vector<16x128xf32> to vector<16x128xbf16>
    %c0_31 = arith.constant 0 : index
    %c0_32 = arith.constant 0 : index
    %38 = vector.load %arg5[%c0_31, %c0_32] : memref<128x128xbf16, #tpu.memory_space<vmem>>, vector<128x128xbf16>
    %cst_33 = arith.constant dense<0.000000e+00> : vector<16x128xf32>
    %39 = tpu.matmul %37, %38, %cst_33 {dimension_numbers = #tpu.dot_dimension_numbers<[1], [0], [0], [1], [0, 0, 1, 1], [], []>} : vector<16x128xbf16>, vector<128x128xbf16>, vector<16x128xf32> -> vector<16x128xf32>
    %c0_34 = arith.constant 0 : index
    %c0_35 = arith.constant 0 : index
    %40 = vector.load %arg6[%c0_34, %c0_35] : memref<1x128xf32, #tpu.memory_space<vmem>>, vector<1x128xf32>
    %41 = vector.broadcast %40 : vector<1x128xf32> to vector<16x128xf32>
    %42 = arith.addf %39, %41 : vector<16x128xf32>
    %43 = arith.negf %42 : vector<16x128xf32>
    %44 = math.exp %43 : vector<16x128xf32>
    %cst_36 = arith.constant 1.000000e+00 : f32
    %45 = vector.broadcast %cst_36 : f32 to vector<16x128xf32>
    %46 = arith.addf %45, %44 : vector<16x128xf32>
    %47 = arith.divf %45, %46 : vector<16x128xf32>
    %c0_37 = arith.constant 0 : index
    %c0_38 = arith.constant 0 : index
    %48 = vector.load %arg7[%c0_37, %c0_38] : memref<16x128xf32, #tpu.memory_space<vmem>>, vector<16x128xf32>
    tpu.vector_store %arg7[%c0_37, %c0_38], %47 {strides = array<i32>} : memref<16x128xf32, #tpu.memory_space<vmem>>, vector<16x128xf32>,
    return
  }
}

</mosaic_0001>

<llo_original>
// kernel: tpu_custom_call.1
$region0: #{tpu_custom_call.1}
  #allocation0 [shape = 'u32[]', space=smem, size = 0x4, offset = 0x4, fixed_abs, tag = 'smem constant byte address 0x4 - core index']
  #allocation1 [shape = 'u32[72,128]{1,0:T(1,128)}', space=vmem, size = 0x9000, scoped, tag = 'internal scratch']
  %s0 = inlined_call_operand.hbm [shape: bf16[256,128], index: 0, kind: input, shape index: {}]
  %s1 = inlined_call_operand.hbm [shape: bf16[256,256], index: 1, kind: input, shape index: {}]
  %s2 = inlined_call_operand.hbm [shape: bf16[2,256,128], index: 2, kind: input, shape index: {}]
  %s3 = inlined_call_operand.vmem [shape: f32[2,1,128], index: 3, kind: input, shape index: {}]
  %s4 = inlined_call_operand.hbm [shape: bf16[16,256], index: 4, kind: input, shape index: {}]
  %s5 = inlined_call_operand.hbm [shape: bf16[128,128], index: 5, kind: input, shape index: {}]
  %s6 = inlined_call_operand.vmem [shape: f32[1,128], index: 6, kind: input, shape index: {}]
  %s7 = inlined_call_operand.hbm [shape: f32[16,128], index: 7, kind: output, shape index: {}]
  %s8 = sld [smem:[#allocation0]]
  $region58: #{tpu_custom_call.1} parent=0
    _
  %s10 = ssub.s32 1, %s8
  %s11 = scalar_select 0, %s10, %s8
  $region1: #{tpu_custom_call.1} parent=0
    #allocation2 [shape = 'u8[65536]{0}', space=vmem, size = 0x10000, scoped, tag = 'input window, operand 0, single buffered']
    #allocation3 [shape = 's32[1]{0}', space=sflag, size = 0x4, scoped, tag = 'scoped memory for tpu_custom_call.1']
    #allocation4 [shape = 's32[1]{0}', space=sflag, size = 0x4, scoped, tag = 'scoped memory for tpu_custom_call.1']
    #allocation5 [shape = 'u8[131072]{0}', space=vmem, size = 0x20000, scoped, tag = 'input window, operand 1, single buffered']
    #allocation6 [shape = 's32[1]{0}', space=sflag, size = 0x4, scoped, tag = 'scoped memory for tpu_custom_call.1']
    #allocation7 [shape = 'u8[131072]{0}', space=vmem, size = 0x20000, scoped, tag = 'input window, operand 2, single buffered']
    #allocation8 [shape = 'u8[8192]{0}', space=vmem, size = 0x2000, scoped, tag = 'input window, operand 4, single buffered']
    #allocation9 [shape = 's32[1]{0}', space=sflag, size = 0x4, scoped, tag = 'scoped memory for tpu_custom_call.1']
    #allocation10 [shape = 'u8[32768]{0}', space=vmem, size = 0x8000, scoped, tag = 'input window, operand 5, single buffered']
    #allocation11 [shape = 'u8[8192]{0}', space=vmem, size = 0x2000, scoped, tag = 'output window, operand 0, single buffered']
    %12 = vsyncpa [#allocation3], 0
    %13 = vsyncpa [#allocation6], 0
    %14 = vsyncpa [#allocation9], 0
    %15 = vsyncpa [#allocation4], 0
    // Predicated region
    $region2: #{tpu_custom_call.1} parent=1 // pred_check
      _
    $region3: #{tpu_custom_call.1} parent=1 // pred_check_branch
      %17 = sbr.rel (0) target = $region5
    $region4: #{tpu_custom_call.1} parent=1 // pred_region
      %19 = vsyncadd [#allocation3], 0
      %s20 = sshll.u32 %s0, 4
      %s21 = int_to_ptr.hbm [resolvable:$true] %s20
      %s22 = sshll.u32 [#allocation2], 4
      %s23 = int_to_ptr.vmem [resolvable:$true] %s22
      %28 = dma.hbm_to_vmem [thread:$0]  %s21, 2048, %s23, [#allocation3], 64, 64, 4
    $region5: #{tpu_custom_call.1} parent=1 // pred_fallthru
      _
    // Predicated region
    $region6: #{tpu_custom_call.1} parent=1 // pred_check
      _
    $region7: #{tpu_custom_call.1} parent=1 // pred_check_branch
      %30 = sbr.rel (0) target = $region9
    $region8: #{tpu_custom_call.1} parent=1 // pred_region
      %32 = vsyncadd [#allocation6], 0
      %s33 = sshll.u32 %s1, 4
      %s34 = int_to_ptr.hbm [resolvable:$true] %s33
      %s35 = sshll.u32 [#allocation5], 4
      %s36 = int_to_ptr.vmem [resolvable:$true] %s35
      %41 = dma.hbm_to_vmem [thread:$0]  %s34, 4096, %s36, [#allocation6], 128, 128, 8
    $region9: #{tpu_custom_call.1} parent=1 // pred_fallthru
      _
    // Predicated region
    $region10: #{tpu_custom_call.1} parent=1 // pred_check
      _
    $region11: #{tpu_custom_call.1} parent=1 // pred_check_branch
      %43 = sbr.rel (0) target = $region13
    $region12: #{tpu_custom_call.1} parent=1 // pred_region
      %45 = vsyncadd [#allocation6], 0
      %s46 = sshll.u32 %s2, 4
      %s47 = int_to_ptr.hbm [resolvable:$true] %s46
      %s48 = sshll.u32 [#allocation7], 4
      %s49 = int_to_ptr.vmem [resolvable:$true] %s48
      %54 = dma.hbm_to_vmem [thread:$0]  %s47, 4096, %s49, [#allocation6], 64, 64, 4
    $region13: #{tpu_custom_call.1} parent=1 // pred_fallthru
      _
    // Predicated region
    $region14: #{tpu_custom_call.1} parent=1 // pred_check
      _
    $region15: #{tpu_custom_call.1} parent=1 // pred_check_branch
      %56 = sbr.rel (0) target = $region17
    $region16: #{tpu_custom_call.1} parent=1 // pred_region
      _
    $region17: #{tpu_custom_call.1} parent=1 // pred_fallthru
      _
    // Predicated region
    $region18: #{tpu_custom_call.1} parent=1 // pred_check
      _
    $region19: #{tpu_custom_call.1} parent=1 // pred_check_branch
      %58 = sbr.rel (0) target = $region21
    $region20: #{tpu_custom_call.1} parent=1 // pred_region
      %60 = vsyncadd [#allocation9], 0
      %s61 = sshll.u32 %s4, 4
      %s62 = int_to_ptr.hbm [resolvable:$true] %s61
      %s63 = sshll.u32 [#allocation8], 4
      %s64 = int_to_ptr.vmem [resolvable:$true] %s63
      %69 = dma.hbm_to_vmem [thread:$0]  %s62, 256, %s64, [#allocation9], 128, 128, 8
    $region21: #{tpu_custom_call.1} parent=1 // pred_fallthru
      _
    // Predicated region
    $region22: #{tpu_custom_call.1} parent=1 // pred_check
      _
    $region23: #{tpu_custom_call.1} parent=1 // pred_check_branch
      %71 = sbr.rel (0) target = $region25
    $region24: #{tpu_custom_call.1} parent=1 // pred_region
      %73 = vsyncadd [#allocation9], 0
      %s74 = sshll.u32 %s5, 4
      %s75 = int_to_ptr.hbm [resolvable:$true] %s74
      %s76 = sshll.u32 [#allocation10], 4
      %s77 = int_to_ptr.vmem [resolvable:$true] %s76
      %82 = dma.hbm_to_vmem [thread:$0]  %s75, 1024, %s77, [#allocation9], 64, 64, 4
    $region25: #{tpu_custom_call.1} parent=1 // pred_fallthru
      _
    // Predicated region
    $region26: #{tpu_custom_call.1} parent=1 // pred_check
      _
    $region27: #{tpu_custom_call.1} parent=1 // pred_check_branch
      %84 = sbr.rel (0) target = $region29
    $region28: #{tpu_custom_call.1} parent=1 // pred_region
      _
    $region29: #{tpu_custom_call.1} parent=1 // pred_fallthru
      _
    // Predicated region
    $region30: #{tpu_custom_call.1} parent=1 // pred_check
      _
    $region31: #{tpu_custom_call.1} parent=1 // pred_check_branch
      %86 = sbr.rel (0) target = $region33
    $region32: #{tpu_custom_call.1} parent=1 // pred_region
      %88 = dma.done [#allocation3], 2048
    $region33: #{tpu_custom_call.1} parent=1 // pred_fallthru
      _
    // Predicated region
    $region34: #{tpu_custom_call.1} parent=1 // pred_check
      _
    $region35: #{tpu_custom_call.1} parent=1 // pred_check_branch
      %90 = sbr.rel (0) target = $region37
    $region36: #{tpu_custom_call.1} parent=1 // pred_region
      %92 = dma.done [#allocation6], 4096
    $region37: #{tpu_custom_call.1} parent=1 // pred_fallthru
      _
    // Predicated region
    $region38: #{tpu_custom_call.1} parent=1 // pred_check
      _
    $region39: #{tpu_custom_call.1} parent=1 // pred_check_branch
      %94 = sbr.rel (0) target = $region41
    $region40: #{tpu_custom_call.1} parent=1 // pred_region
      %96 = dma.done [#allocation6], 4096
    $region41: #{tpu_custom_call.1} parent=1 // pred_fallthru
      _
    // Predicated region
    $region42: #{tpu_custom_call.1} parent=1 // pred_check
      _
    $region43: #{tpu_custom_call.1} parent=1 // pred_check_branch
      %98 = sbr.rel (0) target = $region45
    $region44: #{tpu_custom_call.1} parent=1 // pred_region
      %100 = dma.done [#allocation9], 256
    $region45: #{tpu_custom_call.1} parent=1 // pred_fallthru
      _
    // Predicated region
    $region46: #{tpu_custom_call.1} parent=1 // pred_check
      _
    $region47: #{tpu_custom_call.1} parent=1 // pred_check_branch
      %102 = sbr.rel (0) target = $region49
    $region48: #{tpu_custom_call.1} parent=1 // pred_region
      %104 = dma.done [#allocation9], 1024
    $region49: #{tpu_custom_call.1} parent=1 // pred_fallthru
      _
    %v105 = vld [vmem:[#allocation2] sm:$0xf]
    %v106 = vld [vmem:[#allocation2 + $0x4] sm:$0xf]
    %v107 = vld [vmem:[#allocation2 + $0x8] sm:$0xf]
    %v108 = vld [vmem:[#allocation2 + $0xc] sm:$0xf]
    %v109 = vld [vmem:[#allocation2 + $0x10] sm:$0xf]
    %v110 = vld [vmem:[#allocation2 + $0x14] sm:$0xf]
    %v111 = vld [vmem:[#allocation2 + $0x18] sm:$0xf]
    %v112 = vld [vmem:[#allocation2 + $0x1c] sm:$0xf]
    %v113 = vld [vmem:[#allocation2 + $0x20] sm:$0xf]
    %v114 = vld [vmem:[#allocation2 + $0x24] sm:$0xf]
    %v115 = vld [vmem:[#allocation2 + $0x28] sm:$0xf]
    %v116 = vld [vmem:[#allocation2 + $0x2c] sm:$0xf]
    %v117 = vld [vmem:[#allocation2 + $0x30] sm:$0xf]
    %v118 = vld [vmem:[#allocation2 + $0x34] sm:$0xf]
    %v119 = vld [vmem:[#allocation2 + $0x38] sm:$0xf]
    %v120 = vld [vmem:[#allocation2 + $0x3c] sm:$0xf]
    %v121 = vld [vmem:[#allocation2 + $0x40] sm:$0xf]
    %v122 = vld [vmem:[#allocation2 + $0x44] sm:$0xf]
    %v123 = vld [vmem:[#allocation2 + $0x48] sm:$0xf]
    %v124 = vld [vmem:[#allocation2 + $0x4c] sm:$0xf]
    %v125 = vld [vmem:[#allocation2 + $0x50] sm:$0xf]
    %v126 = vld [vmem:[#allocation2 + $0x54] sm:$0xf]
    %v127 = vld [vmem:[#allocation2 + $0x58] sm:$0xf]
    %v128 = vld [vmem:[#allocation2 + $0x5c] sm:$0xf]
    %v129 = vld [vmem:[#allocation2 + $0x60] sm:$0xf]
    %v130 = vld [vmem:[#allocation2 + $0x64] sm:$0xf]
    %v131 = vld [vmem:[#allocation2 + $0x68] sm:$0xf]
    %v132 = vld [vmem:[#allocation2 + $0x6c] sm:$0xf]
    %v133 = vld [vmem:[#allocation2 + $0x70] sm:$0xf]
    %v134 = vld [vmem:[#allocation2 + $0x74] sm:$0xf]
    %v135 = vld [vmem:[#allocation2 + $0x78] sm:$0xf]
    %v136 = vld [vmem:[#allocation2 + $0x7c] sm:$0xf]
    %v137 = vld [vmem:[#allocation5] sm:$0xff]
    %v138 = vld [vmem:[#allocation5 + $0x8] sm:$0xff]
    %v139 = vld [vmem:[#allocation5 + $0x10] sm:$0xff]
    %v140 = vld [vmem:[#allocation5 + $0x18] sm:$0xff]
    %v141 = vld [vmem:[#allocation5 + $0x20] sm:$0xff]
    %v142 = vld [vmem:[#allocation5 + $0x28] sm:$0xff]
    %v143 = vld [vmem:[#allocation5 + $0x30] sm:$0xff]
    %v144 = vld [vmem:[#allocation5 + $0x38] sm:$0xff]
    %v145 = vld [vmem:[#allocation5 + $0x40] sm:$0xff]
    %v146 = vld [vmem:[#allocation5 + $0x48] sm:$0xff]
    %v147 = vld [vmem:[#allocation5 + $0x50] sm:$0xff]
    %v148 = vld [vmem:[#allocation5 + $0x58] sm:$0xff]
    %v149 = vld [vmem:[#allocation5 + $0x60] sm:$0xff]
    %v150 = vld [vmem:[#allocation5 + $0x68] sm:$0xff]
    %v151 = vld [vmem:[#allocation5 + $0x70] sm:$0xff]
    %v152 = vld [vmem:[#allocation5 + $0x78] sm:$0xff]
    %v153 = vld [vmem:[#allocation5 + $0x80] sm:$0xff]
    %v154 = vld [vmem:[#allocation5 + $0x88] sm:$0xff]
    %v155 = vld [vmem:[#allocation5 + $0x90] sm:$0xff]
    %v156 = vld [vmem:[#allocation5 + $0x98] sm:$0xff]
    %v157 = vld [vmem:[#allocation5 + $0xa0] sm:$0xff]
    %v158 = vld [vmem:[#allocation5 + $0xa8] sm:$0xff]
    %v159 = vld [vmem:[#allocation5 + $0xb0] sm:$0xff]
    %v160 = vld [vmem:[#allocation5 + $0xb8] sm:$0xff]
    %v161 = vld [vmem:[#allocation5 + $0xc0] sm:$0xff]
    %v162 = vld [vmem:[#allocation5 + $0xc8] sm:$0xff]
    %v163 = vld [vmem:[#allocation5 + $0xd0] sm:$0xff]
    %v164 = vld [vmem:[#allocation5 + $0xd8] sm:$0xff]
    %v165 = vld [vmem:[#allocation5 + $0xe0] sm:$0xff]
    %v166 = vld [vmem:[#allocation5 + $0xe8] sm:$0xff]
    %v167 = vld [vmem:[#allocation5 + $0xf0] sm:$0xff]
    %v168 = vld [vmem:[#allocation5 + $0xf8] sm:$0xff]
    %v201 = vunpack.c.l.b16 %v137
    %v202 = vunpack.c.h.b16 %v137
    %v203 = vunpack.c.l.b16 %v138
    %v204 = vunpack.c.h.b16 %v138
    %v205 = vunpack.c.l.b16 %v139
    %v206 = vunpack.c.h.b16 %v139
    %v207 = vunpack.c.l.b16 %v140
    %v208 = vunpack.c.h.b16 %v140
    %v209 = vunpack.c.l.b16 %v141
    %v210 = vunpack.c.h.b16 %v141
    %v211 = vunpack.c.l.b16 %v142
    %v212 = vunpack.c.h.b16 %v142
    %v213 = vunpack.c.l.b16 %v143
    %v214 = vunpack.c.h.b16 %v143
    %v215 = vunpack.c.l.b16 %v144
    %v216 = vunpack.c.h.b16 %v144
    %v217 = vunpack.c.l.b16 %v145
    %v218 = vunpack.c.h.b16 %v145
    %v219 = vunpack.c.l.b16 %v146
    %v220 = vunpack.c.h.b16 %v146
    %v221 = vunpack.c.l.b16 %v147
    %v222 = vunpack.c.h.b16 %v147
    %v223 = vunpack.c.l.b16 %v148
    %v224 = vunpack.c.h.b16 %v148
    %v225 = vunpack.c.l.b16 %v149
    %v226 = vunpack.c.h.b16 %v149
    %v227 = vunpack.c.l.b16 %v150
    %v228 = vunpack.c.h.b16 %v150
    %v229 = vunpack.c.l.b16 %v151
    %v230 = vunpack.c.h.b16 %v151
    %v231 = vunpack.c.l.b16 %v152
    %v232 = vunpack.c.h.b16 %v152
    %v233 = vunpack.c.l.b16 %v153
    %v234 = vunpack.c.h.b16 %v153
    %v235 = vunpack.c.l.b16 %v154
    %v236 = vunpack.c.h.b16 %v154
    %v237 = vunpack.c.l.b16 %v155
    %v238 = vunpack.c.h.b16 %v155
    %v239 = vunpack.c.l.b16 %v156
    %v240 = vunpack.c.h.b16 %v156
    %v241 = vunpack.c.l.b16 %v157
    %v242 = vunpack.c.h.b16 %v157
    %v243 = vunpack.c.l.b16 %v158
    %v244 = vunpack.c.h.b16 %v158
    %v245 = vunpack.c.l.b16 %v159
    %v246 = vunpack.c.h.b16 %v159
    %v247 = vunpack.c.l.b16 %v160
    %v248 = vunpack.c.h.b16 %v160
    %v249 = vunpack.c.l.b16 %v161
    %v250 = vunpack.c.h.b16 %v161
    %v251 = vunpack.c.l.b16 %v162
    %v252 = vunpack.c.h.b16 %v162
    %v253 = vunpack.c.l.b16 %v163
    %v254 = vunpack.c.h.b16 %v163
    %v255 = vunpack.c.l.b16 %v164
    %v256 = vunpack.c.h.b16 %v164
    %v257 = vunpack.c.l.b16 %v165
    %v258 = vunpack.c.h.b16 %v165
    %v259 = vunpack.c.l.b16 %v166
    %v260 = vunpack.c.h.b16 %v166
    %v261 = vunpack.c.l.b16 %v167
    %v262 = vunpack.c.h.b16 %v167
    %v263 = vunpack.c.l.b16 %v168
    %v264 = vunpack.c.h.b16 %v168
    %v265 = vpack.c.b16 %v203, %v201
    %v266 = vpack.c.b16 %v204, %v202
    %v267 = vpack.c.b16 %v207, %v205
    %v268 = vpack.c.b16 %v208, %v206
    %v269 = vpack.c.b16 %v211, %v209
    %v270 = vpack.c.b16 %v212, %v210
    %v271 = vpack.c.b16 %v215, %v213
    %v272 = vpack.c.b16 %v216, %v214
    %v273 = vpack.c.b16 %v219, %v217
    %v274 = vpack.c.b16 %v220, %v218
    %v275 = vpack.c.b16 %v223, %v221
    %v276 = vpack.c.b16 %v224, %v222
    %v277 = vpack.c.b16 %v227, %v225
    %v278 = vpack.c.b16 %v228, %v226
    %v279 = vpack.c.b16 %v231, %v229
    %v280 = vpack.c.b16 %v232, %v230
    %v281 = vpack.c.b16 %v235, %v233
    %v282 = vpack.c.b16 %v236, %v234
    %v283 = vpack.c.b16 %v239, %v237
    %v284 = vpack.c.b16 %v240, %v238
    %v285 = vpack.c.b16 %v243, %v241
    %v286 = vpack.c.b16 %v244, %v242
    %v287 = vpack.c.b16 %v247, %v245
    %v288 = vpack.c.b16 %v248, %v246
    %v289 = vpack.c.b16 %v251, %v249
    %v290 = vpack.c.b16 %v252, %v250
    %v291 = vpack.c.b16 %v255, %v253
    %v292 = vpack.c.b16 %v256, %v254
    %v293 = vpack.c.b16 %v259, %v257
    %v294 = vpack.c.b16 %v260, %v258
    %v295 = vpack.c.b16 %v263, %v261
    %v296 = vpack.c.b16 %v264, %v262
    %v361 = vunpack.c.l.b16 %v105
    %v362 = vunpack.c.l.b16 %v106
    %v363 = vunpack.c.l.b16 %v107
    %v364 = vunpack.c.l.b16 %v108
    %v365 = vunpack.c.l.b16 %v109
    %v366 = vunpack.c.l.b16 %v110
    %v367 = vunpack.c.l.b16 %v111
    %v368 = vunpack.c.l.b16 %v112
    %v369 = vunpack.c.l.b16 %v113
    %v370 = vunpack.c.l.b16 %v114
    %v371 = vunpack.c.l.b16 %v115
    %v372 = vunpack.c.l.b16 %v116
    %v373 = vunpack.c.l.b16 %v117
    %v374 = vunpack.c.l.b16 %v118
    %v375 = vunpack.c.l.b16 %v119
    %v376 = vunpack.c.l.b16 %v120
    %v377 = vunpack.c.l.b16 %v121
    %v378 = vunpack.c.l.b16 %v122
    %v379 = vunpack.c.l.b16 %v123
    %v380 = vunpack.c.l.b16 %v124
    %v381 = vunpack.c.l.b16 %v125
    %v382 = vunpack.c.l.b16 %v126
    %v383 = vunpack.c.l.b16 %v127
    %v384 = vunpack.c.l.b16 %v128
    %v385 = vunpack.c.l.b16 %v129
    %v386 = vunpack.c.l.b16 %v130
    %v387 = vunpack.c.l.b16 %v131
    %v388 = vunpack.c.l.b16 %v132
    %v389 = vunpack.c.l.b16 %v133
    %v390 = vunpack.c.l.b16 %v134
    %v391 = vunpack.c.l.b16 %v135
    %v392 = vunpack.c.l.b16 %v136
    %v393 = vpack.c.b16 %v362, %v361
    %v394 = vpack.c.b16 %v364, %v363
    %v395 = vpack.c.b16 %v366, %v365
    %v396 = vpack.c.b16 %v368, %v367
    %v397 = vpack.c.b16 %v370, %v369
    %v398 = vpack.c.b16 %v372, %v371
    %v399 = vpack.c.b16 %v374, %v373
    %v400 = vpack.c.b16 %v376, %v375
    %v401 = vpack.c.b16 %v378, %v377
    %v402 = vpack.c.b16 %v380, %v379
    %v403 = vpack.c.b16 %v382, %v381
    %v404 = vpack.c.b16 %v384, %v383
    %v405 = vpack.c.b16 %v386, %v385
    %v406 = vpack.c.b16 %v388, %v387
    %v407 = vpack.c.b16 %v390, %v389
    %v408 = vpack.c.b16 %v392, %v391
    %425 = vmatpush.bf16.msra.mxu0 %v400
    %426 = vmatpush.bf16.msra.mxu0 %v399
    %427 = vmatpush.bf16.msra.mxu0 %v398
    %428 = vmatpush.bf16.msra.mxu0 %v397
    %429 = vmatpush.bf16.msra.mxu0 %v396
    %430 = vmatpush.bf16.msra.mxu0 %v395
    %431 = vmatpush.bf16.msra.mxu0 %v394
    %432 = vmatpush.bf16.msra.mxu0 %v393
    %433 = vmatmul.bf16.gmra.mxu0 %v265
    %v434 = vpop.f32.mrf.mxu0
    %v435 = vadd.f32 0.0, %v434
    %v436 = vpop.f32.mrf.mxu0
    %v437 = vadd.f32 0.0, %v436
    %438 = vmatmul.bf16.gmra.mxu0 %v267
    %v439 = vpop.f32.mrf.mxu0
    %v440 = vadd.f32 0.0, %v439
    %v441 = vpop.f32.mrf.mxu0
    %v442 = vadd.f32 0.0, %v441
    %443 = vmatmul.bf16.gmra.mxu0 %v269
    %v444 = vpop.f32.mrf.mxu0
    %v445 = vadd.f32 0.0, %v444
    %v446 = vpop.f32.mrf.mxu0
    %v447 = vadd.f32 0.0, %v446
    %448 = vmatmul.bf16.gmra.mxu0 %v271
    %v449 = vpop.f32.mrf.mxu0
    %v450 = vadd.f32 0.0, %v449
    %v451 = vpop.f32.mrf.mxu0
    %v452 = vadd.f32 0.0, %v451
    %453 = vmatmul.bf16.gmra.mxu0 %v273
    %v454 = vpop.f32.mrf.mxu0
    %v455 = vadd.f32 0.0, %v454
    %v456 = vpop.f32.mrf.mxu0
    %v457 = vadd.f32 0.0, %v456
    %458 = vmatmul.bf16.gmra.mxu0 %v275
    %v459 = vpop.f32.mrf.mxu0
    %v460 = vadd.f32 0.0, %v459
    %v461 = vpop.f32.mrf.mxu0
    %v462 = vadd.f32 0.0, %v461
    %463 = vmatmul.bf16.gmra.mxu0 %v277
    %v464 = vpop.f32.mrf.mxu0
    %v465 = vadd.f32 0.0, %v464
    %v466 = vpop.f32.mrf.mxu0
    %v467 = vadd.f32 0.0, %v466
    %468 = vmatmul.bf16.gmra.mxu0 %v279
    %v469 = vpop.f32.mrf.mxu0
    %v470 = vadd.f32 0.0, %v469
    %v471 = vpop.f32.mrf.mxu0
    %v472 = vadd.f32 0.0, %v471
    %473 = vmatmul.bf16.gmra.mxu0 %v281
    %v474 = vpop.f32.mrf.mxu0
    %v475 = vadd.f32 0.0, %v474
    %v476 = vpop.f32.mrf.mxu0
    %v477 = vadd.f32 0.0, %v476
    %478 = vmatmul.bf16.gmra.mxu0 %v283
    %v479 = vpop.f32.mrf.mxu0
    %v480 = vadd.f32 0.0, %v479
    %v481 = vpop.f32.mrf.mxu0
    %v482 = vadd.f32 0.0, %v481
    %483 = vmatmul.bf16.gmra.mxu0 %v285
    %v484 = vpop.f32.mrf.mxu0
    %v485 = vadd.f32 0.0, %v484
    %v486 = vpop.f32.mrf.mxu0
    %v487 = vadd.f32 0.0, %v486
    %488 = vmatmul.bf16.gmra.mxu0 %v287
    %v489 = vpop.f32.mrf.mxu0
    %v490 = vadd.f32 0.0, %v489
    %v491 = vpop.f32.mrf.mxu0
    %v492 = vadd.f32 0.0, %v491
    %493 = vmatmul.bf16.gmra.mxu0 %v289
    %v494 = vpop.f32.mrf.mxu0
    %v495 = vadd.f32 0.0, %v494
    %v496 = vpop.f32.mrf.mxu0
    %v497 = vadd.f32 0.0, %v496
    %498 = vmatmul.bf16.gmra.mxu0 %v291
    %v499 = vpop.f32.mrf.mxu0
    %v500 = vadd.f32 0.0, %v499
    %v501 = vpop.f32.mrf.mxu0
    %v502 = vadd.f32 0.0, %v501
    %503 = vmatmul.bf16.gmra.mxu0 %v293
    %v504 = vpop.f32.mrf.mxu0
    %v505 = vadd.f32 0.0, %v504
    %v506 = vpop.f32.mrf.mxu0
    %v507 = vadd.f32 0.0, %v506
    %508 = vmatmul.bf16.gmra.mxu0 %v295
    %v509 = vpop.f32.mrf.mxu0
    %v510 = vadd.f32 0.0, %v509
    %v511 = vpop.f32.mrf.mxu0
    %v512 = vadd.f32 0.0, %v511
    %513 = vdwg.mxu0
    %514 = vmatpush.bf16.msra.mxu0 %v408
    %515 = vmatpush.bf16.msra.mxu0 %v407
    %516 = vmatpush.bf16.msra.mxu0 %v406
    %517 = vmatpush.bf16.msra.mxu0 %v405
    %518 = vmatpush.bf16.msra.mxu0 %v404
    %519 = vmatpush.bf16.msra.mxu0 %v403
    %520 = vmatpush.bf16.msra.mxu0 %v402
    %521 = vmatpush.bf16.msra.mxu0 %v401
    %522 = vmatmul.bf16.gmra.mxu0 %v266
    %v523 = vpop.f32.mrf.mxu0
    %v524 = vadd.f32 %v435, %v523
    %v525 = vpop.f32.mrf.mxu0
    %v526 = vadd.f32 %v437, %v525
    %527 = vmatmul.bf16.gmra.mxu0 %v268
    %v528 = vpop.f32.mrf.mxu0
    %v529 = vadd.f32 %v440, %v528
    %v530 = vpop.f32.mrf.mxu0
    %v531 = vadd.f32 %v442, %v530
    %532 = vmatmul.bf16.gmra.mxu0 %v270
    %v533 = vpop.f32.mrf.mxu0
    %v534 = vadd.f32 %v445, %v533
    %v535 = vpop.f32.mrf.mxu0
    %v536 = vadd.f32 %v447, %v535
    %537 = vmatmul.bf16.gmra.mxu0 %v272
    %v538 = vpop.f32.mrf.mxu0
    %v539 = vadd.f32 %v450, %v538
    %v540 = vpop.f32.mrf.mxu0
    %v541 = vadd.f32 %v452, %v540
    %542 = vmatmul.bf16.gmra.mxu0 %v274
    %v543 = vpop.f32.mrf.mxu0
    %v544 = vadd.f32 %v455, %v543
    %v545 = vpop.f32.mrf.mxu0
    %v546 = vadd.f32 %v457, %v545
    %547 = vmatmul.bf16.gmra.mxu0 %v276
    %v548 = vpop.f32.mrf.mxu0
    %v549 = vadd.f32 %v460, %v548
    %v550 = vpop.f32.mrf.mxu0
    %v551 = vadd.f32 %v462, %v550
    %552 = vmatmul.bf16.gmra.mxu0 %v278
    %v553 = vpop.f32.mrf.mxu0
    %v554 = vadd.f32 %v465, %v553
    %v555 = vpop.f32.mrf.mxu0
    %v556 = vadd.f32 %v467, %v555
    %557 = vmatmul.bf16.gmra.mxu0 %v280
    %v558 = vpop.f32.mrf.mxu0
    %v559 = vadd.f32 %v470, %v558
    %v560 = vpop.f32.mrf.mxu0
    %v561 = vadd.f32 %v472, %v560
    %562 = vmatmul.bf16.gmra.mxu0 %v282
    %v563 = vpop.f32.mrf.mxu0
    %v564 = vadd.f32 %v475, %v563
    %v565 = vpop.f32.mrf.mxu0
    %v566 = vadd.f32 %v477, %v565
    %567 = vmatmul.bf16.gmra.mxu0 %v284
    %v568 = vpop.f32.mrf.mxu0
    %v569 = vadd.f32 %v480, %v568
    %v570 = vpop.f32.mrf.mxu0
    %v571 = vadd.f32 %v482, %v570
    %572 = vmatmul.bf16.gmra.mxu0 %v286
    %v573 = vpop.f32.mrf.mxu0
    %v574 = vadd.f32 %v485, %v573
    %v575 = vpop.f32.mrf.mxu0
    %v576 = vadd.f32 %v487, %v575
    %577 = vmatmul.bf16.gmra.mxu0 %v288
    %v578 = vpop.f32.mrf.mxu0
    %v579 = vadd.f32 %v490, %v578
    %v580 = vpop.f32.mrf.mxu0
    %v581 = vadd.f32 %v492, %v580
    %582 = vmatmul.bf16.gmra.mxu0 %v290
    %v583 = vpop.f32.mrf.mxu0
    %v584 = vadd.f32 %v495, %v583
    %v585 = vpop.f32.mrf.mxu0
    %v586 = vadd.f32 %v497, %v585
    %587 = vmatmul.bf16.gmra.mxu0 %v292
    %v588 = vpop.f32.mrf.mxu0
    %v589 = vadd.f32 %v500, %v588
    %v590 = vpop.f32.mrf.mxu0
    %v591 = vadd.f32 %v502, %v590
    %592 = vmatmul.bf16.gmra.mxu0 %v294
    %v593 = vpop.f32.mrf.mxu0
    %v594 = vadd.f32 %v505, %v593
    %v595 = vpop.f32.mrf.mxu0
    %v596 = vadd.f32 %v507, %v595
    %597 = vmatmul.bf16.gmra.mxu0 %v296
    %v598 = vpop.f32.mrf.mxu0
    %v599 = vadd.f32 %v510, %v598
    %v600 = vpop.f32.mrf.mxu0
    %v601 = vadd.f32 %v512, %v600
    %602 = vdwg.mxu0
    %v603 = vpack.c.bf16 %v526, %v524
    %v604 = vpack.c.bf16 %v531, %v529
    %v605 = vpack.c.bf16 %v536, %v534
    %v606 = vpack.c.bf16 %v541, %v539
    %v607 = vpack.c.bf16 %v546, %v544
    %v608 = vpack.c.bf16 %v551, %v549
    %v609 = vpack.c.bf16 %v556, %v554
    %v610 = vpack.c.bf16 %v561, %v559
    %v611 = vpack.c.bf16 %v566, %v564
    %v612 = vpack.c.bf16 %v571, %v569
    %v613 = vpack.c.bf16 %v576, %v574
    %v614 = vpack.c.bf16 %v581, %v579
    %v615 = vpack.c.bf16 %v586, %v584
    %v616 = vpack.c.bf16 %v591, %v589
    %v617 = vpack.c.bf16 %v596, %v594
    %v618 = vpack.c.bf16 %v601, %v599
    %v619 = vld [vmem:[#allocation7] sm:$0xf]
    %v620 = vld [vmem:[#allocation7 + $0x4] sm:$0xf]
    %v621 = vld [vmem:[#allocation7 + $0x8] sm:$0xf]
    %v622 = vld [vmem:[#allocation7 + $0xc] sm:$0xf]
    %v623 = vld [vmem:[#allocation7 + $0x10] sm:$0xf]
    %v624 = vld [vmem:[#allocation7 + $0x14] sm:$0xf]
    %v625 = vld [vmem:[#allocation7 + $0x18] sm:$0xf]
    %v626 = vld [vmem:[#allocation7 + $0x1c] sm:$0xf]
    %v627 = vld [vmem:[#allocation7 + $0x20] sm:$0xf]
    %v628 = vld [vmem:[#allocation7 + $0x24] sm:$0xf]
    %v629 = vld [vmem:[#allocation7 + $0x28] sm:$0xf]
    %v630 = vld [vmem:[#allocation7 + $0x2c] sm:$0xf]
    %v631 = vld [vmem:[#allocation7 + $0x30] sm:$0xf]
    %v632 = vld [vmem:[#allocation7 + $0x34] sm:$0xf]
    %v633 = vld [vmem:[#allocation7 + $0x38] sm:$0xf]
    %v634 = vld [vmem:[#allocation7 + $0x3c] sm:$0xf]
    %v635 = vld [vmem:[#allocation7 + $0x40] sm:$0xf]
    %v636 = vld [vmem:[#allocation7 + $0x44] sm:$0xf]
    %v637 = vld [vmem:[#allocation7 + $0x48] sm:$0xf]
    %v638 = vld [vmem:[#allocation7 + $0x4c] sm:$0xf]
    %v639 = vld [vmem:[#allocation7 + $0x50] sm:$0xf]
    %v640 = vld [vmem:[#allocation7 + $0x54] sm:$0xf]
    %v641 = vld [vmem:[#allocation7 + $0x58] sm:$0xf]
    %v642 = vld [vmem:[#allocation7 + $0x5c] sm:$0xf]
    %v643 = vld [vmem:[#allocation7 + $0x60] sm:$0xf]
    %v644 = vld [vmem:[#allocation7 + $0x64] sm:$0xf]
    %v645 = vld [vmem:[#allocation7 + $0x68] sm:$0xf]
    %v646 = vld [vmem:[#allocation7 + $0x6c] sm:$0xf]
    %v647 = vld [vmem:[#allocation7 + $0x70] sm:$0xf]
    %v648 = vld [vmem:[#allocation7 + $0x74] sm:$0xf]
    %v649 = vld [vmem:[#allocation7 + $0x78] sm:$0xf]
    %v650 = vld [vmem:[#allocation7 + $0x7c] sm:$0xf]
    %v667 = vunpack.c.l.b16 %v635
    %v668 = vunpack.c.l.b16 %v636
    %v669 = vunpack.c.l.b16 %v637
    %v670 = vunpack.c.l.b16 %v638
    %v671 = vunpack.c.l.b16 %v639
    %v672 = vunpack.c.l.b16 %v640
    %v673 = vunpack.c.l.b16 %v641
    %v674 = vunpack.c.l.b16 %v642
    %v675 = vunpack.c.l.b16 %v643
    %v676 = vunpack.c.l.b16 %v644
    %v677 = vunpack.c.l.b16 %v645
    %v678 = vunpack.c.l.b16 %v646
    %v679 = vunpack.c.l.b16 %v647
    %v680 = vunpack.c.l.b16 %v648
    %v681 = vunpack.c.l.b16 %v649
    %v682 = vunpack.c.l.b16 %v650
    %v683 = vpack.c.b16 %v668, %v667
    %v684 = vpack.c.b16 %v670, %v669
    %v685 = vpack.c.b16 %v672, %v671
    %v686 = vpack.c.b16 %v674, %v673
    %v687 = vpack.c.b16 %v676, %v675
    %v688 = vpack.c.b16 %v678, %v677
    %v689 = vpack.c.b16 %v680, %v679
    %v690 = vpack.c.b16 %v682, %v681
    %699 = vmatpush.bf16.msra.mxu0 %v690
    %700 = vmatpush.bf16.msra.mxu0 %v689
    %701 = vmatpush.bf16.msra.mxu0 %v688
    %702 = vmatpush.bf16.msra.mxu0 %v687
    %703 = vmatpush.bf16.msra.mxu0 %v686
    %704 = vmatpush.bf16.msra.mxu0 %v685
    %705 = vmatpush.bf16.msra.mxu0 %v684
    %706 = vmatpush.bf16.msra.mxu0 %v683
    %707 = vmatmul.bf16.gmra.mxu0 %v393
    %v708 = vpop.f32.mrf.mxu0
    %v709 = vadd.f32 0.0, %v708
    %v710 = vpop.f32.mrf.mxu0
    %v711 = vadd.f32 0.0, %v710
    %712 = vmatmul.bf16.gmra.mxu0 %v394
    %v713 = vpop.f32.mrf.mxu0
    %v714 = vadd.f32 0.0, %v713
    %v715 = vpop.f32.mrf.mxu0
    %v716 = vadd.f32 0.0, %v715
    %717 = vmatmul.bf16.gmra.mxu0 %v395
    %v718 = vpop.f32.mrf.mxu0
    %v719 = vadd.f32 0.0, %v718
    %v720 = vpop.f32.mrf.mxu0
    %v721 = vadd.f32 0.0, %v720
    %722 = vmatmul.bf16.gmra.mxu0 %v396
    %v723 = vpop.f32.mrf.mxu0
    %v724 = vadd.f32 0.0, %v723
    %v725 = vpop.f32.mrf.mxu0
    %v726 = vadd.f32 0.0, %v725
    %727 = vmatmul.bf16.gmra.mxu0 %v397
    %v728 = vpop.f32.mrf.mxu0
    %v729 = vadd.f32 0.0, %v728
    %v730 = vpop.f32.mrf.mxu0
    %v731 = vadd.f32 0.0, %v730
    %732 = vmatmul.bf16.gmra.mxu0 %v398
    %v733 = vpop.f32.mrf.mxu0
    %v734 = vadd.f32 0.0, %v733
    %v735 = vpop.f32.mrf.mxu0
    %v736 = vadd.f32 0.0, %v735
    %737 = vmatmul.bf16.gmra.mxu0 %v399
    %v738 = vpop.f32.mrf.mxu0
    %v739 = vadd.f32 0.0, %v738
    %v740 = vpop.f32.mrf.mxu0
    %v741 = vadd.f32 0.0, %v740
    %742 = vmatmul.bf16.gmra.mxu0 %v400
    %v743 = vpop.f32.mrf.mxu0
    %v744 = vadd.f32 0.0, %v743
    %v745 = vpop.f32.mrf.mxu0
    %v746 = vadd.f32 0.0, %v745
    %747 = vmatmul.bf16.gmra.mxu0 %v401
    %v748 = vpop.f32.mrf.mxu0
    %v749 = vadd.f32 0.0, %v748
    %v750 = vpop.f32.mrf.mxu0
    %v751 = vadd.f32 0.0, %v750
    %752 = vmatmul.bf16.gmra.mxu0 %v402
    %v753 = vpop.f32.mrf.mxu0
    %v754 = vadd.f32 0.0, %v753
    %v755 = vpop.f32.mrf.mxu0
    %v756 = vadd.f32 0.0, %v755
    %757 = vmatmul.bf16.gmra.mxu0 %v403
    %v758 = vpop.f32.mrf.mxu0
    %v759 = vadd.f32 0.0, %v758
    %v760 = vpop.f32.mrf.mxu0
    %v761 = vadd.f32 0.0, %v760
    %762 = vmatmul.bf16.gmra.mxu0 %v404
    %v763 = vpop.f32.mrf.mxu0
    %v764 = vadd.f32 0.0, %v763
    %v765 = vpop.f32.mrf.mxu0
    %v766 = vadd.f32 0.0, %v765
    %767 = vmatmul.bf16.gmra.mxu0 %v405
    %v768 = vpop.f32.mrf.mxu0
    %v769 = vadd.f32 0.0, %v768
    %v770 = vpop.f32.mrf.mxu0
    %v771 = vadd.f32 0.0, %v770
    %772 = vmatmul.bf16.gmra.mxu0 %v406
    %v773 = vpop.f32.mrf.mxu0
    %v774 = vadd.f32 0.0, %v773
    %v775 = vpop.f32.mrf.mxu0
    %v776 = vadd.f32 0.0, %v775
    %777 = vmatmul.bf16.gmra.mxu0 %v407
    %v778 = vpop.f32.mrf.mxu0
    %v779 = vadd.f32 0.0, %v778
    %v780 = vpop.f32.mrf.mxu0
    %v781 = vadd.f32 0.0, %v780
    %782 = vmatmul.bf16.gmra.mxu0 %v408
    %v783 = vpop.f32.mrf.mxu0
    %v784 = vadd.f32 0.0, %v783
    %v785 = vpop.f32.mrf.mxu0
    %v786 = vadd.f32 0.0, %v785
    %787 = vdwg.mxu0
    %v804 = vunpack.c.l.b16 %v619
    %v805 = vunpack.c.l.b16 %v620
    %v806 = vunpack.c.l.b16 %v621
    %v807 = vunpack.c.l.b16 %v622
    %v808 = vunpack.c.l.b16 %v623
    %v809 = vunpack.c.l.b16 %v624
    %v810 = vunpack.c.l.b16 %v625
    %v811 = vunpack.c.l.b16 %v626
    %v812 = vunpack.c.l.b16 %v627
    %v813 = vunpack.c.l.b16 %v628
    %v814 = vunpack.c.l.b16 %v629
    %v815 = vunpack.c.l.b16 %v630
    %v816 = vunpack.c.l.b16 %v631
    %v817 = vunpack.c.l.b16 %v632
    %v818 = vunpack.c.l.b16 %v633
    %v819 = vunpack.c.l.b16 %v634
    %v820 = vpack.c.b16 %v805, %v804
    %v821 = vpack.c.b16 %v807, %v806
    %v822 = vpack.c.b16 %v809, %v808
    %v823 = vpack.c.b16 %v811, %v810
    %v824 = vpack.c.b16 %v813, %v812
    %v825 = vpack.c.b16 %v815, %v814
    %v826 = vpack.c.b16 %v817, %v816
    %v827 = vpack.c.b16 %v819, %v818
    %836 = vmatpush.bf16.msra.mxu0 %v827
    %837 = vmatpush.bf16.msra.mxu0 %v826
    %838 = vmatpush.bf16.msra.mxu0 %v825
    %839 = vmatpush.bf16.msra.mxu0 %v824
    %840 = vmatpush.bf16.msra.mxu0 %v823
    %841 = vmatpush.bf16.msra.mxu0 %v822
    %842 = vmatpush.bf16.msra.mxu0 %v821
    %843 = vmatpush.bf16.msra.mxu0 %v820
    %844 = vmatmul.bf16.gmra.mxu0 %v603
    %v845 = vpop.f32.mrf.mxu0
    %v846 = vadd.f32 %v709, %v845
    %v847 = vpop.f32.mrf.mxu0
    %v848 = vadd.f32 %v711, %v847
    %849 = vmatmul.bf16.gmra.mxu0 %v604
    %v850 = vpop.f32.mrf.mxu0
    %v851 = vadd.f32 %v714, %v850
    %v852 = vpop.f32.mrf.mxu0
    %v853 = vadd.f32 %v716, %v852
    %854 = vmatmul.bf16.gmra.mxu0 %v605
    %v855 = vpop.f32.mrf.mxu0
    %v856 = vadd.f32 %v719, %v855
    %v857 = vpop.f32.mrf.mxu0
    %v858 = vadd.f32 %v721, %v857
    %859 = vmatmul.bf16.gmra.mxu0 %v606
    %v860 = vpop.f32.mrf.mxu0
    %v861 = vadd.f32 %v724, %v860
    %v862 = vpop.f32.mrf.mxu0
    %v863 = vadd.f32 %v726, %v862
    %864 = vmatmul.bf16.gmra.mxu0 %v607
    %v865 = vpop.f32.mrf.mxu0
    %v866 = vadd.f32 %v729, %v865
    %v867 = vpop.f32.mrf.mxu0
    %v868 = vadd.f32 %v731, %v867
    %869 = vmatmul.bf16.gmra.mxu0 %v608
    %v870 = vpop.f32.mrf.mxu0
    %v871 = vadd.f32 %v734, %v870
    %v872 = vpop.f32.mrf.mxu0
    %v873 = vadd.f32 %v736, %v872
    %874 = vmatmul.bf16.gmra.mxu0 %v609
    %v875 = vpop.f32.mrf.mxu0
    %v876 = vadd.f32 %v739, %v875
    %v877 = vpop.f32.mrf.mxu0
    %v878 = vadd.f32 %v741, %v877
    %879 = vmatmul.bf16.gmra.mxu0 %v610
    %v880 = vpop.f32.mrf.mxu0
    %v881 = vadd.f32 %v744, %v880
    %v882 = vpop.f32.mrf.mxu0
    %v883 = vadd.f32 %v746, %v882
    %884 = vmatmul.bf16.gmra.mxu0 %v611
    %v885 = vpop.f32.mrf.mxu0
    %v886 = vadd.f32 %v749, %v885
    %v887 = vpop.f32.mrf.mxu0
    %v888 = vadd.f32 %v751, %v887
    %889 = vmatmul.bf16.gmra.mxu0 %v612
    %v890 = vpop.f32.mrf.mxu0
    %v891 = vadd.f32 %v754, %v890
    %v892 = vpop.f32.mrf.mxu0
    %v893 = vadd.f32 %v756, %v892
    %894 = vmatmul.bf16.gmra.mxu0 %v613
    %v895 = vpop.f32.mrf.mxu0
    %v896 = vadd.f32 %v759, %v895
    %v897 = vpop.f32.mrf.mxu0
    %v898 = vadd.f32 %v761, %v897
    %899 = vmatmul.bf16.gmra.mxu0 %v614
    %v900 = vpop.f32.mrf.mxu0
    %v901 = vadd.f32 %v764, %v900
    %v902 = vpop.f32.mrf.mxu0
    %v903 = vadd.f32 %v766, %v902
    %904 = vmatmul.bf16.gmra.mxu0 %v615
    %v905 = vpop.f32.mrf.mxu0
    %v906 = vadd.f32 %v769, %v905
    %v907 = vpop.f32.mrf.mxu0
    %v908 = vadd.f32 %v771, %v907
    %909 = vmatmul.bf16.gmra.mxu0 %v616
    %v910 = vpop.f32.mrf.mxu0
    %v911 = vadd.f32 %v774, %v910
    %v912 = vpop.f32.mrf.mxu0
    %v913 = vadd.f32 %v776, %v912
    %914 = vmatmul.bf16.gmra.mxu0 %v617
    %v915 = vpop.f32.mrf.mxu0
    %v916 = vadd.f32 %v779, %v915
    %v917 = vpop.f32.mrf.mxu0
    %v918 = vadd.f32 %v781, %v917
    %919 = vmatmul.bf16.gmra.mxu0 %v618
    %v920 = vpop.f32.mrf.mxu0
    %v921 = vadd.f32 %v784, %v920
    %v922 = vpop.f32.mrf.mxu0
    %v923 = vadd.f32 %v786, %v922
    %924 = vdwg.mxu0
    %v925 = vld [vmem:[%s3] sm:$0x1]
    %v927 = vperm.slane %v925, 0
    %v929 = vadd.f32 %v846, %v927
    %v930 = vadd.f32 %v848, %v927
    %v931 = vadd.f32 %v851, %v927
    %v932 = vadd.f32 %v853, %v927
    %v933 = vadd.f32 %v856, %v927
    %v934 = vadd.f32 %v858, %v927
    %v935 = vadd.f32 %v861, %v927
    %v936 = vadd.f32 %v863, %v927
    %v937 = vadd.f32 %v866, %v927
    %v938 = vadd.f32 %v868, %v927
    %v939 = vadd.f32 %v871, %v927
    %v940 = vadd.f32 %v873, %v927
    %v941 = vadd.f32 %v876, %v927
    %v942 = vadd.f32 %v878, %v927
    %v943 = vadd.f32 %v881, %v927
    %v944 = vadd.f32 %v883, %v927
    %v945 = vadd.f32 %v886, %v927
    %v946 = vadd.f32 %v888, %v927
    %v947 = vadd.f32 %v891, %v927
    %v948 = vadd.f32 %v893, %v927
    %v949 = vadd.f32 %v896, %v927
    %v950 = vadd.f32 %v898, %v927
    %v951 = vadd.f32 %v901, %v927
    %v952 = vadd.f32 %v903, %v927
    %v953 = vadd.f32 %v906, %v927
    %v954 = vadd.f32 %v908, %v927
    %v955 = vadd.f32 %v911, %v927
    %v956 = vadd.f32 %v913, %v927
    %v957 = vadd.f32 %v916, %v927
    %v958 = vadd.f32 %v918, %v927
    %v959 = vadd.f32 %v921, %v927
    %v960 = vadd.f32 %v923, %v927
    %v961 = vmax.f32 %v929, 0.0
    %v962 = vmax.f32 %v930, 0.0
    %v963 = vmax.f32 %v931, 0.0
    %v964 = vmax.f32 %v932, 0.0
    %v965 = vmax.f32 %v933, 0.0
    %v966 = vmax.f32 %v934, 0.0
    %v967 = vmax.f32 %v935, 0.0
    %v968 = vmax.f32 %v936, 0.0
    %v969 = vmax.f32 %v937, 0.0
    %v970 = vmax.f32 %v938, 0.0
    %v971 = vmax.f32 %v939, 0.0
    %v972 = vmax.f32 %v940, 0.0
    %v973 = vmax.f32 %v941, 0.0
    %v974 = vmax.f32 %v942, 0.0
    %v975 = vmax.f32 %v943, 0.0
    %v976 = vmax.f32 %v944, 0.0
    %v977 = vmax.f32 %v945, 0.0
    %v978 = vmax.f32 %v946, 0.0
    %v979 = vmax.f32 %v947, 0.0
    %v980 = vmax.f32 %v948, 0.0
    %v981 = vmax.f32 %v949, 0.0
    %v982 = vmax.f32 %v950, 0.0
    %v983 = vmax.f32 %v951, 0.0
    %v984 = vmax.f32 %v952, 0.0
    %v985 = vmax.f32 %v953, 0.0
    %v986 = vmax.f32 %v954, 0.0
    %v987 = vmax.f32 %v955, 0.0
    %v988 = vmax.f32 %v956, 0.0
    %v989 = vmax.f32 %v957, 0.0
    %v990 = vmax.f32 %v958, 0.0
    %v991 = vmax.f32 %v959, 0.0
    %v992 = vmax.f32 %v960, 0.0
    %v993 = vpack.c.bf16 %v962, %v961
    %v994 = vpack.c.bf16 %v964, %v963
    %v995 = vpack.c.bf16 %v966, %v965
    %v996 = vpack.c.bf16 %v968, %v967
    %v997 = vpack.c.bf16 %v970, %v969
    %v998 = vpack.c.bf16 %v972, %v971
    %v999 = vpack.c.bf16 %v974, %v973
    %v1000 = vpack.c.bf16 %v976, %v975
    %v1001 = vpack.c.bf16 %v978, %v977
    %v1002 = vpack.c.bf16 %v980, %v979
    %v1003 = vpack.c.bf16 %v982, %v981
    %v1004 = vpack.c.bf16 %v984, %v983
    %v1005 = vpack.c.bf16 %v986, %v985
    %v1006 = vpack.c.bf16 %v988, %v987
    %v1007 = vpack.c.bf16 %v990, %v989
    %v1008 = vpack.c.bf16 %v992, %v991
    %1009 = vmatpush.bf16.msra.mxu0 %v1000
    %1010 = vmatpush.bf16.msra.mxu0 %v999
    %1011 = vmatpush.bf16.msra.mxu0 %v998
    %1012 = vmatpush.bf16.msra.mxu0 %v997
    %1013 = vmatpush.bf16.msra.mxu0 %v996
    %1014 = vmatpush.bf16.msra.mxu0 %v995
    %1015 = vmatpush.bf16.msra.mxu0 %v994
    %1016 = vmatpush.bf16.msra.mxu0 %v993
    %1017 = vmatmul.bf16.gmra.mxu0 %v265
    %v1018 = vpop.f32.mrf.mxu0
    %v1019 = vadd.f32 0.0, %v1018
    %v1020 = vpop.f32.mrf.mxu0
    %v1021 = vadd.f32 0.0, %v1020
    %1022 = vmatmul.bf16.gmra.mxu0 %v267
    %v1023 = vpop.f32.mrf.mxu0
    %v1024 = vadd.f32 0.0, %v1023
    %v1025 = vpop.f32.mrf.mxu0
    %v1026 = vadd.f32 0.0, %v1025
    %1027 = vmatmul.bf16.gmra.mxu0 %v269
    %v1028 = vpop.f32.mrf.mxu0
    %v1029 = vadd.f32 0.0, %v1028
    %v1030 = vpop.f32.mrf.mxu0
    %v1031 = vadd.f32 0.0, %v1030
    %1032 = vmatmul.bf16.gmra.mxu0 %v271
    %v1033 = vpop.f32.mrf.mxu0
    %v1034 = vadd.f32 0.0, %v1033
    %v1035 = vpop.f32.mrf.mxu0
    %v1036 = vadd.f32 0.0, %v1035
    %1037 = vmatmul.bf16.gmra.mxu0 %v273
    %v1038 = vpop.f32.mrf.mxu0
    %v1039 = vadd.f32 0.0, %v1038
    %v1040 = vpop.f32.mrf.mxu0
    %v1041 = vadd.f32 0.0, %v1040
    %1042 = vmatmul.bf16.gmra.mxu0 %v275
    %v1043 = vpop.f32.mrf.mxu0
    %v1044 = vadd.f32 0.0, %v1043
    %v1045 = vpop.f32.mrf.mxu0
    %v1046 = vadd.f32 0.0, %v1045
    %1047 = vmatmul.bf16.gmra.mxu0 %v277
    %v1048 = vpop.f32.mrf.mxu0
    %v1049 = vadd.f32 0.0, %v1048
    %v1050 = vpop.f32.mrf.mxu0
    %v1051 = vadd.f32 0.0, %v1050
    %1052 = vmatmul.bf16.gmra.mxu0 %v279
    %v1053 = vpop.f32.mrf.mxu0
    %v1054 = vadd.f32 0.0, %v1053
    %v1055 = vpop.f32.mrf.mxu0
    %v1056 = vadd.f32 0.0, %v1055
    %1057 = vmatmul.bf16.gmra.mxu0 %v281
    %v1058 = vpop.f32.mrf.mxu0
    %v1059 = vadd.f32 0.0, %v1058
    %v1060 = vpop.f32.mrf.mxu0
    %v1061 = vadd.f32 0.0, %v1060
    %1062 = vmatmul.bf16.gmra.mxu0 %v283
    %v1063 = vpop.f32.mrf.mxu0
    %v1064 = vadd.f32 0.0, %v1063
    %v1065 = vpop.f32.mrf.mxu0
    %v1066 = vadd.f32 0.0, %v1065
    %1067 = vmatmul.bf16.gmra.mxu0 %v285
    %v1068 = vpop.f32.mrf.mxu0
    %v1069 = vadd.f32 0.0, %v1068
    %v1070 = vpop.f32.mrf.mxu0
    %v1071 = vadd.f32 0.0, %v1070
    %1072 = vmatmul.bf16.gmra.mxu0 %v287
    %v1073 = vpop.f32.mrf.mxu0
    %v1074 = vadd.f32 0.0, %v1073
    %v1075 = vpop.f32.mrf.mxu0
    %v1076 = vadd.f32 0.0, %v1075
    %1077 = vmatmul.bf16.gmra.mxu0 %v289
    %v1078 = vpop.f32.mrf.mxu0
    %v1079 = vadd.f32 0.0, %v1078
    %v1080 = vpop.f32.mrf.mxu0
    %v1081 = vadd.f32 0.0, %v1080
    %1082 = vmatmul.bf16.gmra.mxu0 %v291
    %v1083 = vpop.f32.mrf.mxu0
    %v1084 = vadd.f32 0.0, %v1083
    %v1085 = vpop.f32.mrf.mxu0
    %v1086 = vadd.f32 0.0, %v1085
    %1087 = vmatmul.bf16.gmra.mxu0 %v293
    %v1088 = vpop.f32.mrf.mxu0
    %v1089 = vadd.f32 0.0, %v1088
    %v1090 = vpop.f32.mrf.mxu0
    %v1091 = vadd.f32 0.0, %v1090
    %1092 = vmatmul.bf16.gmra.mxu0 %v295
    %v1093 = vpop.f32.mrf.mxu0
    %v1094 = vadd.f32 0.0, %v1093
    %v1095 = vpop.f32.mrf.mxu0
    %v1096 = vadd.f32 0.0, %v1095
    %1097 = vdwg.mxu0
    %1098 = vmatpush.bf16.msra.mxu0 %v1008
    %1099 = vmatpush.bf16.msra.mxu0 %v1007
    %1100 = vmatpush.bf16.msra.mxu0 %v1006
    %1101 = vmatpush.bf16.msra.mxu0 %v1005
    %1102 = vmatpush.bf16.msra.mxu0 %v1004
    %1103 = vmatpush.bf16.msra.mxu0 %v1003
    %1104 = vmatpush.bf16.msra.mxu0 %v1002
    %1105 = vmatpush.bf16.msra.mxu0 %v1001
    %1106 = vmatmul.bf16.gmra.mxu0 %v266
    %v1107 = vpop.f32.mrf.mxu0
    %v1108 = vadd.f32 %v1019, %v1107
    %v1109 = vpop.f32.mrf.mxu0
    %v1110 = vadd.f32 %v1021, %v1109
    %1111 = vmatmul.bf16.gmra.mxu0 %v268
    %v1112 = vpop.f32.mrf.mxu0
    %v1113 = vadd.f32 %v1024, %v1112
    %v1114 = vpop.f32.mrf.mxu0
    %v1115 = vadd.f32 %v1026, %v1114
    %1116 = vmatmul.bf16.gmra.mxu0 %v270
    %v1117 = vpop.f32.mrf.mxu0
    %v1118 = vadd.f32 %v1029, %v1117
    %v1119 = vpop.f32.mrf.mxu0
    %v1120 = vadd.f32 %v1031, %v1119
    %1121 = vmatmul.bf16.gmra.mxu0 %v272
    %v1122 = vpop.f32.mrf.mxu0
    %v1123 = vadd.f32 %v1034, %v1122
    %v1124 = vpop.f32.mrf.mxu0
    %v1125 = vadd.f32 %v1036, %v1124
    %1126 = vmatmul.bf16.gmra.mxu0 %v274
    %v1127 = vpop.f32.mrf.mxu0
    %v1128 = vadd.f32 %v1039, %v1127
    %v1129 = vpop.f32.mrf.mxu0
    %v1130 = vadd.f32 %v1041, %v1129
    %1131 = vmatmul.bf16.gmra.mxu0 %v276
    %v1132 = vpop.f32.mrf.mxu0
    %v1133 = vadd.f32 %v1044, %v1132
    %v1134 = vpop.f32.mrf.mxu0
    %v1135 = vadd.f32 %v1046, %v1134
    %1136 = vmatmul.bf16.gmra.mxu0 %v278
    %v1137 = vpop.f32.mrf.mxu0
    %v1138 = vadd.f32 %v1049, %v1137
    %v1139 = vpop.f32.mrf.mxu0
    %v1140 = vadd.f32 %v1051, %v1139
    %1141 = vmatmul.bf16.gmra.mxu0 %v280
    %v1142 = vpop.f32.mrf.mxu0
    %v1143 = vadd.f32 %v1054, %v1142
    %v1144 = vpop.f32.mrf.mxu0
    %v1145 = vadd.f32 %v1056, %v1144
    %1146 = vmatmul.bf16.gmra.mxu0 %v282
    %v1147 = vpop.f32.mrf.mxu0
    %v1148 = vadd.f32 %v1059, %v1147
    %v1149 = vpop.f32.mrf.mxu0
    %v1150 = vadd.f32 %v1061, %v1149
    %1151 = vmatmul.bf16.gmra.mxu0 %v284
    %v1152 = vpop.f32.mrf.mxu0
    %v1153 = vadd.f32 %v1064, %v1152
    %v1154 = vpop.f32.mrf.mxu0
    %v1155 = vadd.f32 %v1066, %v1154
    %1156 = vmatmul.bf16.gmra.mxu0 %v286
    %v1157 = vpop.f32.mrf.mxu0
    %v1158 = vadd.f32 %v1069, %v1157
    %v1159 = vpop.f32.mrf.mxu0
    %v1160 = vadd.f32 %v1071, %v1159
    %1161 = vmatmul.bf16.gmra.mxu0 %v288
    %v1162 = vpop.f32.mrf.mxu0
    %v1163 = vadd.f32 %v1074, %v1162
    %v1164 = vpop.f32.mrf.mxu0
    %v1165 = vadd.f32 %v1076, %v1164
    %1166 = vmatmul.bf16.gmra.mxu0 %v290
    %v1167 = vpop.f32.mrf.mxu0
    %v1168 = vadd.f32 %v1079, %v1167
    %v1169 = vpop.f32.mrf.mxu0
    %v1170 = vadd.f32 %v1081, %v1169
    %1171 = vmatmul.bf16.gmra.mxu0 %v292
    %v1172 = vpop.f32.mrf.mxu0
    %v1173 = vadd.f32 %v1084, %v1172
    %v1174 = vpop.f32.mrf.mxu0
    %v1175 = vadd.f32 %v1086, %v1174
    %1176 = vmatmul.bf16.gmra.mxu0 %v294
    %v1177 = vpop.f32.mrf.mxu0
    %v1178 = vadd.f32 %v1089, %v1177
    %v1179 = vpop.f32.mrf.mxu0
    %v1180 = vadd.f32 %v1091, %v1179
    %1181 = vmatmul.bf16.gmra.mxu0 %v296
    %v1182 = vpop.f32.mrf.mxu0
    %v1183 = vadd.f32 %v1094, %v1182
    %v1184 = vpop.f32.mrf.mxu0
    %v1185 = vadd.f32 %v1096, %v1184
    %1186 = vdwg.mxu0
    %v1187 = vpack.c.bf16 %v1110, %v1108
    %v1188 = vpack.c.bf16 %v1115, %v1113
    %v1189 = vpack.c.bf16 %v1120, %v1118
    %v1190 = vpack.c.bf16 %v1125, %v1123
    %v1191 = vpack.c.bf16 %v1130, %v1128
    %v1192 = vpack.c.bf16 %v1135, %v1133
    %v1193 = vpack.c.bf16 %v1140, %v1138
    %v1194 = vpack.c.bf16 %v1145, %v1143
    %v1195 = vpack.c.bf16 %v1150, %v1148
    %v1196 = vpack.c.bf16 %v1155, %v1153
    %v1197 = vpack.c.bf16 %v1160, %v1158
    %v1198 = vpack.c.bf16 %v1165, %v1163
    %v1199 = vpack.c.bf16 %v1170, %v1168
    %v1200 = vpack.c.bf16 %v1175, %v1173
    %v1201 = vpack.c.bf16 %v1180, %v1178
    %v1202 = vpack.c.bf16 %v1185, %v1183
    %s1203 = scalar_lea.vmem [#allocation7], 128
    %v1204 = vld [vmem:[%s1203] sm:$0xf]
    %v1205 = vld [vmem:[%s1203 + $0x4] sm:$0xf]
    %v1206 = vld [vmem:[%s1203 + $0x8] sm:$0xf]
    %v1207 = vld [vmem:[%s1203 + $0xc] sm:$0xf]
    %v1208 = vld [vmem:[%s1203 + $0x10] sm:$0xf]
    %v1209 = vld [vmem:[%s1203 + $0x14] sm:$0xf]
    %v1210 = vld [vmem:[%s1203 + $0x18] sm:$0xf]
    %v1211 = vld [vmem:[%s1203 + $0x1c] sm:$0xf]
    %v1212 = vld [vmem:[%s1203 + $0x20] sm:$0xf]
    %v1213 = vld [vmem:[%s1203 + $0x24] sm:$0xf]
    %v1214 = vld [vmem:[%s1203 + $0x28] sm:$0xf]
    %v1215 = vld [vmem:[%s1203 + $0x2c] sm:$0xf]
    %v1216 = vld [vmem:[%s1203 + $0x30] sm:$0xf]
    %v1217 = vld [vmem:[%s1203 + $0x34] sm:$0xf]
    %v1218 = vld [vmem:[%s1203 + $0x38] sm:$0xf]
    %v1219 = vld [vmem:[%s1203 + $0x3c] sm:$0xf]
    %v1220 = vld [vmem:[%s1203 + $0x40] sm:$0xf]
    %v1221 = vld [vmem:[%s1203 + $0x44] sm:$0xf]
    %v1222 = vld [vmem:[%s1203 + $0x48] sm:$0xf]
    %v1223 = vld [vmem:[%s1203 + $0x4c] sm:$0xf]
    %v1224 = vld [vmem:[%s1203 + $0x50] sm:$0xf]
    %v1225 = vld [vmem:[%s1203 + $0x54] sm:$0xf]
    %v1226 = vld [vmem:[%s1203 + $0x58] sm:$0xf]
    %v1227 = vld [vmem:[%s1203 + $0x5c] sm:$0xf]
    %v1228 = vld [vmem:[%s1203 + $0x60] sm:$0xf]
    %v1229 = vld [vmem:[%s1203 + $0x64] sm:$0xf]
    %v1230 = vld [vmem:[%s1203 + $0x68] sm:$0xf]
    %v1231 = vld [vmem:[%s1203 + $0x6c] sm:$0xf]
    %v1232 = vld [vmem:[%s1203 + $0x70] sm:$0xf]
    %v1233 = vld [vmem:[%s1203 + $0x74] sm:$0xf]
    %v1234 = vld [vmem:[%s1203 + $0x78] sm:$0xf]
    %v1235 = vld [vmem:[%s1203 + $0x7c] sm:$0xf]
    %v1252 = vunpack.c.l.b16 %v1220
    %v1253 = vunpack.c.l.b16 %v1221
    %v1254 = vunpack.c.l.b16 %v1222
    %v1255 = vunpack.c.l.b16 %v1223
    %v1256 = vunpack.c.l.b16 %v1224
    %v1257 = vunpack.c.l.b16 %v1225
    %v1258 = vunpack.c.l.b16 %v1226
    %v1259 = vunpack.c.l.b16 %v1227
    %v1260 = vunpack.c.l.b16 %v1228
    %v1261 = vunpack.c.l.b16 %v1229
    %v1262 = vunpack.c.l.b16 %v1230
    %v1263 = vunpack.c.l.b16 %v1231
    %v1264 = vunpack.c.l.b16 %v1232
    %v1265 = vunpack.c.l.b16 %v1233
    %v1266 = vunpack.c.l.b16 %v1234
    %v1267 = vunpack.c.l.b16 %v1235
    %v1268 = vpack.c.b16 %v1253, %v1252
    %v1269 = vpack.c.b16 %v1255, %v1254
    %v1270 = vpack.c.b16 %v1257, %v1256
    %v1271 = vpack.c.b16 %v1259, %v1258
    %v1272 = vpack.c.b16 %v1261, %v1260
    %v1273 = vpack.c.b16 %v1263, %v1262
    %v1274 = vpack.c.b16 %v1265, %v1264
    %v1275 = vpack.c.b16 %v1267, %v1266
    %1284 = vmatpush.bf16.msra.mxu0 %v1275
    %1285 = vmatpush.bf16.msra.mxu0 %v1274
    %1286 = vmatpush.bf16.msra.mxu0 %v1273
    %1287 = vmatpush.bf16.msra.mxu0 %v1272
    %1288 = vmatpush.bf16.msra.mxu0 %v1271
    %1289 = vmatpush.bf16.msra.mxu0 %v1270
    %1290 = vmatpush.bf16.msra.mxu0 %v1269
    %1291 = vmatpush.bf16.msra.mxu0 %v1268
    %1292 = vmatmul.bf16.gmra.mxu0 %v993
    %v1293 = vpop.f32.mrf.mxu0
    %v1294 = vadd.f32 0.0, %v1293
    %v1295 = vpop.f32.mrf.mxu0
    %v1296 = vadd.f32 0.0, %v1295
    %1297 = vmatmul.bf16.gmra.mxu0 %v994
    %v1298 = vpop.f32.mrf.mxu0
    %v1299 = vadd.f32 0.0, %v1298
    %v1300 = vpop.f32.mrf.mxu0
    %v1301 = vadd.f32 0.0, %v1300
    %1302 = vmatmul.bf16.gmra.mxu0 %v995
    %v1303 = vpop.f32.mrf.mxu0
    %v1304 = vadd.f32 0.0, %v1303
    %v1305 = vpop.f32.mrf.mxu0
    %v1306 = vadd.f32 0.0, %v1305
    %1307 = vmatmul.bf16.gmra.mxu0 %v996
    %v1308 = vpop.f32.mrf.mxu0
    %v1309 = vadd.f32 0.0, %v1308
    %v1310 = vpop.f32.mrf.mxu0
    %v1311 = vadd.f32 0.0, %v1310
    %1312 = vmatmul.bf16.gmra.mxu0 %v997
    %v1313 = vpop.f32.mrf.mxu0
    %v1314 = vadd.f32 0.0, %v1313
    %v1315 = vpop.f32.mrf.mxu0
    %v1316 = vadd.f32 0.0, %v1315
    %1317 = vmatmul.bf16.gmra.mxu0 %v998
    %v1318 = vpop.f32.mrf.mxu0
    %v1319 = vadd.f32 0.0, %v1318
    %v1320 = vpop.f32.mrf.mxu0
    %v1321 = vadd.f32 0.0, %v1320
    %1322 = vmatmul.bf16.gmra.mxu0 %v999
    %v1323 = vpop.f32.mrf.mxu0
    %v1324 = vadd.f32 0.0, %v1323
    %v1325 = vpop.f32.mrf.mxu0
    %v1326 = vadd.f32 0.0, %v1325
    %1327 = vmatmul.bf16.gmra.mxu0 %v1000
    %v1328 = vpop.f32.mrf.mxu0
    %v1329 = vadd.f32 0.0, %v1328
    %v1330 = vpop.f32.mrf.mxu0
    %v1331 = vadd.f32 0.0, %v1330
    %1332 = vmatmul.bf16.gmra.mxu0 %v1001
    %v1333 = vpop.f32.mrf.mxu0
    %v1334 = vadd.f32 0.0, %v1333
    %v1335 = vpop.f32.mrf.mxu0
    %v1336 = vadd.f32 0.0, %v1335
    %1337 = vmatmul.bf16.gmra.mxu0 %v1002
    %v1338 = vpop.f32.mrf.mxu0
    %v1339 = vadd.f32 0.0, %v1338
    %v1340 = vpop.f32.mrf.mxu0
    %v1341 = vadd.f32 0.0, %v1340
    %1342 = vmatmul.bf16.gmra.mxu0 %v1003
    %v1343 = vpop.f32.mrf.mxu0
    %v1344 = vadd.f32 0.0, %v1343
    %v1345 = vpop.f32.mrf.mxu0
    %v1346 = vadd.f32 0.0, %v1345
    %1347 = vmatmul.bf16.gmra.mxu0 %v1004
    %v1348 = vpop.f32.mrf.mxu0
    %v1349 = vadd.f32 0.0, %v1348
    %v1350 = vpop.f32.mrf.mxu0
    %v1351 = vadd.f32 0.0, %v1350
    %1352 = vmatmul.bf16.gmra.mxu0 %v1005
    %v1353 = vpop.f32.mrf.mxu0
    %v1354 = vadd.f32 0.0, %v1353
    %v1355 = vpop.f32.mrf.mxu0
    %v1356 = vadd.f32 0.0, %v1355
    %1357 = vmatmul.bf16.gmra.mxu0 %v1006
    %v1358 = vpop.f32.mrf.mxu0
    %v1359 = vadd.f32 0.0, %v1358
    %v1360 = vpop.f32.mrf.mxu0
    %v1361 = vadd.f32 0.0, %v1360
    %1362 = vmatmul.bf16.gmra.mxu0 %v1007
    %v1363 = vpop.f32.mrf.mxu0
    %v1364 = vadd.f32 0.0, %v1363
    %v1365 = vpop.f32.mrf.mxu0
    %v1366 = vadd.f32 0.0, %v1365
    %1367 = vmatmul.bf16.gmra.mxu0 %v1008
    %v1368 = vpop.f32.mrf.mxu0
    %v1369 = vadd.f32 0.0, %v1368
    %v1370 = vpop.f32.mrf.mxu0
    %v1371 = vadd.f32 0.0, %v1370
    %1372 = vdwg.mxu0
    %v1389 = vunpack.c.l.b16 %v1204
    %v1390 = vunpack.c.l.b16 %v1205
    %v1391 = vunpack.c.l.b16 %v1206
    %v1392 = vunpack.c.l.b16 %v1207
    %v1393 = vunpack.c.l.b16 %v1208
    %v1394 = vunpack.c.l.b16 %v1209
    %v1395 = vunpack.c.l.b16 %v1210
    %v1396 = vunpack.c.l.b16 %v1211
    %v1397 = vunpack.c.l.b16 %v1212
    %v1398 = vunpack.c.l.b16 %v1213
    %v1399 = vunpack.c.l.b16 %v1214
    %v1400 = vunpack.c.l.b16 %v1215
    %v1401 = vunpack.c.l.b16 %v1216
    %v1402 = vunpack.c.l.b16 %v1217
    %v1403 = vunpack.c.l.b16 %v1218
    %v1404 = vunpack.c.l.b16 %v1219
    %v1405 = vpack.c.b16 %v1390, %v1389
    %v1406 = vpack.c.b16 %v1392, %v1391
    %v1407 = vpack.c.b16 %v1394, %v1393
    %v1408 = vpack.c.b16 %v1396, %v1395
    %v1409 = vpack.c.b16 %v1398, %v1397
    %v1410 = vpack.c.b16 %v1400, %v1399
    %v1411 = vpack.c.b16 %v1402, %v1401
    %v1412 = vpack.c.b16 %v1404, %v1403
    %1421 = vmatpush.bf16.msra.mxu0 %v1412
    %1422 = vmatpush.bf16.msra.mxu0 %v1411
    %1423 = vmatpush.bf16.msra.mxu0 %v1410
    %1424 = vmatpush.bf16.msra.mxu0 %v1409
    %1425 = vmatpush.bf16.msra.mxu0 %v1408
    %1426 = vmatpush.bf16.msra.mxu0 %v1407
    %1427 = vmatpush.bf16.msra.mxu0 %v1406
    %1428 = vmatpush.bf16.msra.mxu0 %v1405
    %1429 = vmatmul.bf16.gmra.mxu0 %v1187
    %v1430 = vpop.f32.mrf.mxu0
    %v1431 = vadd.f32 %v1294, %v1430
    %v1432 = vpop.f32.mrf.mxu0
    %v1433 = vadd.f32 %v1296, %v1432
    %1434 = vmatmul.bf16.gmra.mxu0 %v1188
    %v1435 = vpop.f32.mrf.mxu0
    %v1436 = vadd.f32 %v1299, %v1435
    %v1437 = vpop.f32.mrf.mxu0
    %v1438 = vadd.f32 %v1301, %v1437
    %1439 = vmatmul.bf16.gmra.mxu0 %v1189
    %v1440 = vpop.f32.mrf.mxu0
    %v1441 = vadd.f32 %v1304, %v1440
    %v1442 = vpop.f32.mrf.mxu0
    %v1443 = vadd.f32 %v1306, %v1442
    %1444 = vmatmul.bf16.gmra.mxu0 %v1190
    %v1445 = vpop.f32.mrf.mxu0
    %v1446 = vadd.f32 %v1309, %v1445
    %v1447 = vpop.f32.mrf.mxu0
    %v1448 = vadd.f32 %v1311, %v1447
    %1449 = vmatmul.bf16.gmra.mxu0 %v1191
    %v1450 = vpop.f32.mrf.mxu0
    %v1451 = vadd.f32 %v1314, %v1450
    %v1452 = vpop.f32.mrf.mxu0
    %v1453 = vadd.f32 %v1316, %v1452
    %1454 = vmatmul.bf16.gmra.mxu0 %v1192
    %v1455 = vpop.f32.mrf.mxu0
    %v1456 = vadd.f32 %v1319, %v1455
    %v1457 = vpop.f32.mrf.mxu0
    %v1458 = vadd.f32 %v1321, %v1457
    %1459 = vmatmul.bf16.gmra.mxu0 %v1193
    %v1460 = vpop.f32.mrf.mxu0
    %v1461 = vadd.f32 %v1324, %v1460
    %v1462 = vpop.f32.mrf.mxu0
    %v1463 = vadd.f32 %v1326, %v1462
    %1464 = vmatmul.bf16.gmra.mxu0 %v1194
    %v1465 = vpop.f32.mrf.mxu0
    %v1466 = vadd.f32 %v1329, %v1465
    %v1467 = vpop.f32.mrf.mxu0
    %v1468 = vadd.f32 %v1331, %v1467
    %1469 = vmatmul.bf16.gmra.mxu0 %v1195
    %v1470 = vpop.f32.mrf.mxu0
    %v1471 = vadd.f32 %v1334, %v1470
    %v1472 = vpop.f32.mrf.mxu0
    %v1473 = vadd.f32 %v1336, %v1472
    %1474 = vmatmul.bf16.gmra.mxu0 %v1196
    %v1475 = vpop.f32.mrf.mxu0
    %v1476 = vadd.f32 %v1339, %v1475
    %v1477 = vpop.f32.mrf.mxu0
    %v1478 = vadd.f32 %v1341, %v1477
    %1479 = vmatmul.bf16.gmra.mxu0 %v1197
    %v1480 = vpop.f32.mrf.mxu0
    %v1481 = vadd.f32 %v1344, %v1480
    %v1482 = vpop.f32.mrf.mxu0
    %v1483 = vadd.f32 %v1346, %v1482
    %1484 = vmatmul.bf16.gmra.mxu0 %v1198
    %v1485 = vpop.f32.mrf.mxu0
    %v1486 = vadd.f32 %v1349, %v1485
    %v1487 = vpop.f32.mrf.mxu0
    %v1488 = vadd.f32 %v1351, %v1487
    %1489 = vmatmul.bf16.gmra.mxu0 %v1199
    %v1490 = vpop.f32.mrf.mxu0
    %v1491 = vadd.f32 %v1354, %v1490
    %v1492 = vpop.f32.mrf.mxu0
    %v1493 = vadd.f32 %v1356, %v1492
    %1494 = vmatmul.bf16.gmra.mxu0 %v1200
    %v1495 = vpop.f32.mrf.mxu0
    %v1496 = vadd.f32 %v1359, %v1495
    %v1497 = vpop.f32.mrf.mxu0
    %v1498 = vadd.f32 %v1361, %v1497
    %1499 = vmatmul.bf16.gmra.mxu0 %v1201
    %v1500 = vpop.f32.mrf.mxu0
    %v1501 = vadd.f32 %v1364, %v1500
    %v1502 = vpop.f32.mrf.mxu0
    %v1503 = vadd.f32 %v1366, %v1502
    %1504 = vmatmul.bf16.gmra.mxu0 %v1202
    %v1505 = vpop.f32.mrf.mxu0
    %v1506 = vadd.f32 %v1369, %v1505
    %v1507 = vpop.f32.mrf.mxu0
    %v1508 = vadd.f32 %v1371, %v1507
    %1509 = vdwg.mxu0
    %s1510 = scalar_lea.vmem %s3, 1
    %v1511 = vld [vmem:[%s1510] sm:$0x1]
    %v1513 = vperm.slane %v1511, 0
    %v1515 = vadd.f32 %v1431, %v1513
    %v1516 = vadd.f32 %v1433, %v1513
    %v1517 = vadd.f32 %v1436, %v1513
    %v1518 = vadd.f32 %v1438, %v1513
    %v1519 = vadd.f32 %v1441, %v1513
    %v1520 = vadd.f32 %v1443, %v1513
    %v1521 = vadd.f32 %v1446, %v1513
    %v1522 = vadd.f32 %v1448, %v1513
    %v1523 = vadd.f32 %v1451, %v1513
    %v1524 = vadd.f32 %v1453, %v1513
    %v1525 = vadd.f32 %v1456, %v1513
    %v1526 = vadd.f32 %v1458, %v1513
    %v1527 = vadd.f32 %v1461, %v1513
    %v1528 = vadd.f32 %v1463, %v1513
    %v1529 = vadd.f32 %v1466, %v1513
    %v1530 = vadd.f32 %v1468, %v1513
    %v1531 = vadd.f32 %v1471, %v1513
    %v1532 = vadd.f32 %v1473, %v1513
    %v1533 = vadd.f32 %v1476, %v1513
    %v1534 = vadd.f32 %v1478, %v1513
    %v1535 = vadd.f32 %v1481, %v1513
    %v1536 = vadd.f32 %v1483, %v1513
    %v1537 = vadd.f32 %v1486, %v1513
    %v1538 = vadd.f32 %v1488, %v1513
    %v1539 = vadd.f32 %v1491, %v1513
    %v1540 = vadd.f32 %v1493, %v1513
    %v1541 = vadd.f32 %v1496, %v1513
    %v1542 = vadd.f32 %v1498, %v1513
    %v1543 = vadd.f32 %v1501, %v1513
    %v1544 = vadd.f32 %v1503, %v1513
    %v1545 = vadd.f32 %v1506, %v1513
    %v1546 = vadd.f32 %v1508, %v1513
    %v1547 = vmax.f32 %v1515, 0.0
    %v1548 = vmax.f32 %v1516, 0.0
    %v1549 = vmax.f32 %v1517, 0.0
    %v1550 = vmax.f32 %v1518, 0.0
    %v1551 = vmax.f32 %v1519, 0.0
    %v1552 = vmax.f32 %v1520, 0.0
    %v1553 = vmax.f32 %v1521, 0.0
    %v1554 = vmax.f32 %v1522, 0.0
    %v1555 = vmax.f32 %v1523, 0.0
    %v1556 = vmax.f32 %v1524, 0.0
    %v1557 = vmax.f32 %v1525, 0.0
    %v1558 = vmax.f32 %v1526, 0.0
    %v1559 = vmax.f32 %v1527, 0.0
    %v1560 = vmax.f32 %v1528, 0.0
    %v1561 = vmax.f32 %v1529, 0.0
    %v1562 = vmax.f32 %v1530, 0.0
    %v1563 = vmax.f32 %v1531, 0.0
    %v1564 = vmax.f32 %v1532, 0.0
    %v1565 = vmax.f32 %v1533, 0.0
    %v1566 = vmax.f32 %v1534, 0.0
    %v1567 = vmax.f32 %v1535, 0.0
    %v1568 = vmax.f32 %v1536, 0.0
    %v1569 = vmax.f32 %v1537, 0.0
    %v1570 = vmax.f32 %v1538, 0.0
    %v1571 = vmax.f32 %v1539, 0.0
    %v1572 = vmax.f32 %v1540, 0.0
    %v1573 = vmax.f32 %v1541, 0.0
    %v1574 = vmax.f32 %v1542, 0.0
    %v1575 = vmax.f32 %v1543, 0.0
    %v1576 = vmax.f32 %v1544, 0.0
    %v1577 = vmax.f32 %v1545, 0.0
    %v1578 = vmax.f32 %v1546, 0.0
    %v1579 = vpack.c.bf16 %v1548, %v1547
    %v1580 = vpack.c.bf16 %v1550, %v1549
    %v1581 = vpack.c.bf16 %v1552, %v1551
    %v1582 = vpack.c.bf16 %v1554, %v1553
    %v1583 = vpack.c.bf16 %v1556, %v1555
    %v1584 = vpack.c.bf16 %v1558, %v1557
    %v1585 = vpack.c.bf16 %v1560, %v1559
    %v1586 = vpack.c.bf16 %v1562, %v1561
    %v1587 = vpack.c.bf16 %v1564, %v1563
    %v1588 = vpack.c.bf16 %v1566, %v1565
    %v1589 = vpack.c.bf16 %v1568, %v1567
    %v1590 = vpack.c.bf16 %v1570, %v1569
    %v1591 = vpack.c.bf16 %v1572, %v1571
    %v1592 = vpack.c.bf16 %v1574, %v1573
    %v1593 = vpack.c.bf16 %v1576, %v1575
    %v1594 = vpack.c.bf16 %v1578, %v1577
    %v1595 = vld [vmem:[#allocation8] sm:$0xff]
    %v1596 = vld [vmem:[#allocation8 + $0x8] sm:$0xff]
    %v1599 = vunpack.c.l.b16 %v1595
    %v1600 = vunpack.c.h.b16 %v1595
    %v1601 = vunpack.c.l.b16 %v1596
    %v1602 = vunpack.c.h.b16 %v1596
    %v1603 = vpack.c.b16 %v1601, %v1599
    %v1604 = vpack.c.b16 %v1602, %v1600
    %1607 = vmatpush.bf16.msra.mxu0 %v1586
    %1608 = vmatpush.bf16.msra.mxu0 %v1585
    %1609 = vmatpush.bf16.msra.mxu0 %v1584
    %1610 = vmatpush.bf16.msra.mxu0 %v1583
    %1611 = vmatpush.bf16.msra.mxu0 %v1582
    %1612 = vmatpush.bf16.msra.mxu0 %v1581
    %1613 = vmatpush.bf16.msra.mxu0 %v1580
    %1614 = vmatpush.bf16.msra.mxu0 %v1579
    %1615 = vmatmul.bf16.gmra.mxu0 %v1603
    %v1616 = vpop.f32.mrf.mxu0
    %v1617 = vadd.f32 0.0, %v1616
    %v1618 = vpop.f32.mrf.mxu0
    %v1619 = vadd.f32 0.0, %v1618
    %1620 = vdwg.mxu0
    %1621 = vmatpush.bf16.msra.mxu0 %v1594
    %1622 = vmatpush.bf16.msra.mxu0 %v1593
    %1623 = vmatpush.bf16.msra.mxu0 %v1592
    %1624 = vmatpush.bf16.msra.mxu0 %v1591
    %1625 = vmatpush.bf16.msra.mxu0 %v1590
    %1626 = vmatpush.bf16.msra.mxu0 %v1589
    %1627 = vmatpush.bf16.msra.mxu0 %v1588
    %1628 = vmatpush.bf16.msra.mxu0 %v1587
    %1629 = vmatmul.bf16.gmra.mxu0 %v1604
    %v1630 = vpop.f32.mrf.mxu0
    %v1631 = vadd.f32 %v1617, %v1630
    %v1632 = vpop.f32.mrf.mxu0
    %v1633 = vadd.f32 %v1619, %v1632
    %1634 = vdwg.mxu0
    %v1635 = vpack.c.bf16 %v1633, %v1631
    %v1636 = vld [vmem:[#allocation10] sm:$0xf]
    %v1637 = vld [vmem:[#allocation10 + $0x4] sm:$0xf]
    %v1638 = vld [vmem:[#allocation10 + $0x8] sm:$0xf]
    %v1639 = vld [vmem:[#allocation10 + $0xc] sm:$0xf]
    %v1640 = vld [vmem:[#allocation10 + $0x10] sm:$0xf]
    %v1641 = vld [vmem:[#allocation10 + $0x14] sm:$0xf]
    %v1642 = vld [vmem:[#allocation10 + $0x18] sm:$0xf]
    %v1643 = vld [vmem:[#allocation10 + $0x1c] sm:$0xf]
    %v1644 = vld [vmem:[#allocation10 + $0x20] sm:$0xf]
    %v1645 = vld [vmem:[#allocation10 + $0x24] sm:$0xf]
    %v1646 = vld [vmem:[#allocation10 + $0x28] sm:$0xf]
    %v1647 = vld [vmem:[#allocation10 + $0x2c] sm:$0xf]
    %v1648 = vld [vmem:[#allocation10 + $0x30] sm:$0xf]
    %v1649 = vld [vmem:[#allocation10 + $0x34] sm:$0xf]
    %v1650 = vld [vmem:[#allocation10 + $0x38] sm:$0xf]
    %v1651 = vld [vmem:[#allocation10 + $0x3c] sm:$0xf]
    %v1652 = vld [vmem:[%s6] sm:$0x1]
    %v1654 = vperm.slane %v1652, 0
    %v1672 = vunpack.c.l.b16 %v1636
    %v1673 = vunpack.c.l.b16 %v1637
    %v1674 = vunpack.c.l.b16 %v1638
    %v1675 = vunpack.c.l.b16 %v1639
    %v1676 = vunpack.c.l.b16 %v1640
    %v1677 = vunpack.c.l.b16 %v1641
    %v1678 = vunpack.c.l.b16 %v1642
    %v1679 = vunpack.c.l.b16 %v1643
    %v1680 = vunpack.c.l.b16 %v1644
    %v1681 = vunpack.c.l.b16 %v1645
    %v1682 = vunpack.c.l.b16 %v1646
    %v1683 = vunpack.c.l.b16 %v1647
    %v1684 = vunpack.c.l.b16 %v1648
    %v1685 = vunpack.c.l.b16 %v1649
    %v1686 = vunpack.c.l.b16 %v1650
    %v1687 = vunpack.c.l.b16 %v1651
    %v1688 = vpack.c.b16 %v1673, %v1672
    %v1689 = vpack.c.b16 %v1675, %v1674
    %v1690 = vpack.c.b16 %v1677, %v1676
    %v1691 = vpack.c.b16 %v1679, %v1678
    %v1692 = vpack.c.b16 %v1681, %v1680
    %v1693 = vpack.c.b16 %v1683, %v1682
    %v1694 = vpack.c.b16 %v1685, %v1684
    %v1695 = vpack.c.b16 %v1687, %v1686
    %1704 = vmatpush.bf16.msra.mxu0 %v1695
    %1705 = vmatpush.bf16.msra.mxu0 %v1694
    %1706 = vmatpush.bf16.msra.mxu0 %v1693
    %1707 = vmatpush.bf16.msra.mxu0 %v1692
    %1708 = vmatpush.bf16.msra.mxu0 %v1691
    %1709 = vmatpush.bf16.msra.mxu0 %v1690
    %1710 = vmatpush.bf16.msra.mxu0 %v1689
    %1711 = vmatpush.bf16.msra.mxu0 %v1688
    %1712 = vmatmul.bf16.gmra.mxu0 %v1635
    %v1713 = vpop.f32.mrf.mxu0
    %v1714 = vadd.f32 %v1654, %v1713
    %v1715 = vpop.f32.mrf.mxu0
    %v1716 = vadd.f32 %v1654, %v1715
    %1717 = vdwg.mxu0
    %v1718 = vxor.u32 %v1714, 2147483648
    %v1719 = vxor.u32 %v1716, 2147483648
    %v1720 = vmul.f32 %v1718, 1.442695
    %v1721 = vpow.pop %v1720
    %v1722 = vmul.f32 %v1719, 1.442695
    %v1723 = vpow.pop %v1722
    %v1724 = vadd.f32 %v1721, 1.0
    %v1725 = vadd.f32 %v1723, 1.0
    %v1726 = vrcp.pop %v1724
    %v1727 = vmul.f32 %v1724, %v1726
    %v1728 = vsub.f32 1.0, %v1727
    %v1729 = vmul.f32 %v1726, %v1728
    %v1730 = vadd.f32 %v1726, %v1729
    %vm1731 = vweird.f32 %v1724
    %vm1732 = vweird.f32 %v1726
    %vm1733 = vmor %vm1731, %vm1732
    %v1734 = vsel %vm1733, %v1726, %v1730
    %v1735 = vand.u32 2147483647, %v1724
    %vm1736 = vcmp.eq.f32.partialorder %v1735, 8.507059e+37
    %v1737 = vand.u32 %v1724, 2147483648
    %v1738 = vor.u32 1.1754944e-38, %v1737
    %v1739 = vsel %vm1736, %v1738, %v1734
    %v1740 = vmul.f32 1.0, %v1739
    %v1741 = vrcp.pop %v1725
    %v1742 = vmul.f32 %v1725, %v1741
    %v1743 = vsub.f32 1.0, %v1742
    %v1744 = vmul.f32 %v1741, %v1743
    %v1745 = vadd.f32 %v1741, %v1744
    %vm1746 = vweird.f32 %v1725
    %vm1747 = vweird.f32 %v1741
    %vm1748 = vmor %vm1746, %vm1747
    %v1749 = vsel %vm1748, %v1741, %v1745
    %v1750 = vand.u32 2147483647, %v1725
    %vm1751 = vcmp.eq.f32.partialorder %v1750, 8.507059e+37
    %v1752 = vand.u32 %v1725, 2147483648
    %v1753 = vor.u32 1.1754944e-38, %v1752
    %v1754 = vsel %vm1751, %v1753, %v1749
    %v1755 = vmul.f32 1.0, %v1754
    %1756 = vst [vmem:[#allocation11] sm:$0xff] %v1740
    %1757 = vst [vmem:[#allocation11 + $0x8] sm:$0xff] %v1755
    // Predicated region
    $region50: #{tpu_custom_call.1} parent=1 // pred_check
      _
    $region51: #{tpu_custom_call.1} parent=1 // pred_check_branch
      %1759 = sbr.rel (0) target = $region53
    $region52: #{tpu_custom_call.1} parent=1 // pred_region
      %1761 = vsyncadd [#allocation4], 0
      %s1762 = sshll.u32 [#allocation11], 4
      %s1763 = int_to_ptr.vmem [resolvable:$true] %s1762
      %s1764 = sshll.u32 %s7, 4
      %s1765 = int_to_ptr.hbm [resolvable:$true] %s1764
      %1770 = dma.vmem_to_hbm [thread:$0]  %s1763, 256, %s1765, [#allocation4], 128, 128, 8
    $region53: #{tpu_custom_call.1} parent=1 // pred_fallthru
      _
    // Predicated region
    $region54: #{tpu_custom_call.1} parent=1 // pred_check
      _
    $region55: #{tpu_custom_call.1} parent=1 // pred_check_branch
      %1772 = sbr.rel (0) target = $region57
    $region56: #{tpu_custom_call.1} parent=1 // pred_region
      %1774 = dma.done [#allocation4], 256
    $region57: #{tpu_custom_call.1} parent=1 // pred_fallthru
      _
    %1775 = vsyncpa [#allocation3], 1
    %1776 = vsyncpa [#allocation6], 1
    %1777 = vsyncpa [#allocation9], 1
    %1778 = vsyncpa [#allocation4], 1

</llo_original>
